<compile_context>
chip_gen: v6e
topology: v6e:2x2x1
jax: 0.10.0
libtpu: 0.0.40
codegen_flags: <defaults>
</compile_context>

<pallas_src>
import jax
import jax.numpy as jnp
from jax import lax
from jax.experimental import pallas as pl
from jax.experimental.pallas import tpu as pltpu

# ----- hyper-parameters: Bottle2neck(inplanes=8, planes=16, kernel_size=3, dilation=2, scale=4) -----
INPLANES = 8
PLANES = 16
KERNEL_SIZE = 3
DILATION = 2
SCALE = 4
WIDTH = PLANES // SCALE              # int(floor(planes / scale)) = 4
NUMS = SCALE - 1
PAD = (KERNEL_SIZE // 2) * DILATION  # = 2
BN_EPS = 1e-5
LANE = 128

SHIFTS = tuple(j * DILATION - PAD for j in range(KERNEL_SIZE))   # (-2, 0, +2)

# ----- parameter-slab row layout (all matrices channels-first, zero-padded to 16 cols) -----
R_WIN = 0        # rows  0:32  fused [w_res (16,8); w1 (16,8)]
R_WC = 32        # rows 32:56  branch i at 32+8*i : +4, (WIDTH, KERNEL_SIZE*WIDTH) = (4,12)
R_W3 = 56        # rows 56:72  (16,16)
R_WFC = 72       # rows 72:88  (16,16)  nn.Linear weight (out, in)
R_VEC = 88       # rows 88:104 per-channel vectors stored as columns
SLAB_ROWS = 104
SLAB_COLS = 16
# vector columns: 0=b1 1=g1 2=be1 3=b3 4=g3 5=be3 6=alpha 7=bfc 8=bc 9=gc 10=bec
# (branch vectors bc/gc/bec: branch i occupies rows R_VEC+4*i : R_VEC+4*i+4)


def pack_params(p):
    """Pack all logical parameters into a single lane-contiguous f32 slab."""
    slab = jnp.zeros((SLAB_ROWS, SLAB_COLS), jnp.float32)
    slab = slab.at[R_WIN:R_WIN + PLANES, :INPLANES].set(p["wr"])
    slab = slab.at[R_WIN + PLANES:R_WIN + PLANES + WIDTH * SCALE, :INPLANES].set(p["w1"])
    for i in range(NUMS):
        slab = slab.at[R_WC + 8 * i:R_WC + 8 * i + WIDTH, :KERNEL_SIZE * WIDTH].set(p["wc"][i])
    slab = slab.at[R_W3:R_W3 + PLANES, :WIDTH * SCALE].set(p["w3"])
    slab = slab.at[R_WFC:R_WFC + PLANES, :PLANES].set(p["wfc"])
    for name, col in (("b1", 0), ("g1", 1), ("be1", 2), ("b3", 3), ("g3", 4),
                      ("be3", 5), ("alpha", 6), ("bfc", 7)):
        slab = slab.at[R_VEC:R_VEC + PLANES, col].set(p[name])
    for i in range(NUMS):
        slab = slab.at[R_VEC + 4 * i:R_VEC + 4 * i + WIDTH, 8].set(p["bc"][i])
        slab = slab.at[R_VEC + 4 * i:R_VEC + 4 * i + WIDTH, 9].set(p["gc"][i])
        slab = slab.at[R_VEC + 4 * i:R_VEC + 4 * i + WIDTH, 10].set(p["bec"][i])
    return slab


def _make_kernel(B, T, TP):
    BTP = B * TP
    inv_n = 1.0 / float(B * T)
    inv_t = 1.0 / float(T)

    def kernel(x_ref, slab_ref, o_ref, cat_ref):
        slab = slab_ref[...]                       # (SLAB_ROWS, SLAB_COLS) f32
        # bf16 -> f32 once after load (v5e VPU has no bf16); compute stays f32.
        x = x_ref[...].astype(jnp.float32)         # (INPLANES, BTP), zeros in padded cols

        # valid-time mask generated in-kernel (no mask DMA): 1.0 where t < T.
        tmask = (lax.broadcasted_iota(jnp.int32, (1, TP), 1) < T).astype(jnp.float32)
        valid = jnp.concatenate([tmask] * B, axis=1) if B > 1 else tmask   # (1, BTP)

        def vcol(col, r0=R_VEC, n=PLANES):         # per-channel vector as (n, 1) column
            return slab[r0:r0 + n, col:col + 1]

        def bn(h, gamma, beta):
            # masked single-pass biased batch stats (training-mode BatchNorm1d);
            # hv is reused for both moments and the variance is clamped >= 0 to
            # guard the E[x^2]-E[x]^2 cancellation before rsqrt.
            hv = h * valid
            mean = jnp.sum(hv, axis=1, keepdims=True) * inv_n
            var = jnp.maximum(jnp.sum(hv * hv, axis=1, keepdims=True) * inv_n
                              - mean * mean, 0.0)
            scale = gamma * lax.rsqrt(var + BN_EPS)
            # trailing *valid keeps padded columns exactly zero -> shift invariant.
            return (hv * scale + (beta - mean * scale)) * valid

        def shifted(a, s):
            # `a` is zero in every padded column and TP >= T + PAD, so the roll
            # wrap (across batches / array ends) always reads zeros == Conv1d
            # zero padding; no masks needed.
            if s == 0:
                return a
            return pltpu.roll(a, (-s) % BTP, 1)

        # ---- fused residual 1x1 conv + conv1 (one matmul on x) ----
        w_in = slab[R_WIN:R_WIN + PLANES + WIDTH * SCALE, :INPLANES]   # (32, 8)
        hin = jnp.dot(w_in, x, preferred_element_type=jnp.float32)     # (32, BTP)
        residual = hin[:PLANES, :]                                     # zero in padded cols
        h = bn(jnp.maximum(hin[PLANES:, :] + vcol(0), 0.0), vcol(1), vcol(2))   # conv1+relu+bn1

        # ---- Res2Net branches: per-tap (4,4)@(4,BTP) dots, outputs into VMEM scratch ----
        sp = None
        for i in range(NUMS):
            xsp = h[i * WIDTH:(i + 1) * WIDTH, :]
            sp = xsp if i == 0 else sp + xsp
            acc = None
            for j, s in enumerate(SHIFTS):
                w_tap = slab[R_WC + 8 * i:R_WC + 8 * i + WIDTH,
                             j * WIDTH:(j + 1) * WIDTH]                # (4, 4)
                d = jnp.dot(w_tap, shifted(sp, s), preferred_element_type=jnp.float32)
                acc = d if acc is None else acc + d
            r0 = R_VEC + WIDTH * i
            sp = bn(jnp.maximum(acc + vcol(8, r0, WIDTH), 0.0),
                    vcol(9, r0, WIDTH), vcol(10, r0, WIDTH))
            cat_ref[i * WIDTH:(i + 1) * WIDTH, :] = sp
        cat_ref[NUMS * WIDTH:PLANES, :] = h[NUMS * WIDTH:, :]

        # ---- conv3 -> relu -> bn3, add residual ----
        w3 = slab[R_W3:R_W3 + PLANES, :WIDTH * SCALE]
        h3 = bn(jnp.maximum(jnp.dot(w3, cat_ref[...],
                                    preferred_element_type=jnp.float32) + vcol(3), 0.0),
                vcol(4), vcol(5))
        h3 = h3 + residual                                             # zero in padded cols

        # ---- AFMS: sigmoid(fc(time-mean)) gate, (h + alpha) * gate ----
        # Per-batch work uses contiguous 128-aligned lane slices, so the total
        # cost is one pass over the data regardless of B (no per-batch masks).
        wfc = slab[R_WFC:R_WFC + PLANES, :PLANES]
        hf = jnp.dot(wfc, h3, preferred_element_type=jnp.float32)      # (16, BTP), zero in pad
        alpha = vcol(6)
        bfc = vcol(7)
        for b in range(B):
            lo, hi = b * TP, (b + 1) * TP
            gate = jax.nn.sigmoid(
                jnp.sum(hf[:, lo:hi], axis=1, keepdims=True) * inv_t + bfc)    # (16, 1)
            o_ref[:, lo:hi] = ((h3[:, lo:hi] + alpha) * gate).astype(o_ref.dtype)

    return kernel


def bottle2neck(x_nct, slab):
    """x_nct: (B, INPLANES, T) in PyTorch NCT layout -> (B, PLANES, T) bf16."""
    B, C, T = x_nct.shape
    assert C == INPLANES
    # Pad time to a multiple of 128 with at least PAD spare columns so the
    # roll-based shifts always wrap into a zero region.
    TP = -(-(T + PAD) // LANE) * LANE
    assert TP >= T + PAD
    BTP = B * TP

    # channels-first, lane-dense bf16 activation slab: (INPLANES, B*TP), zero-padded time
    x_cbt = jnp.transpose(
        jnp.pad(x_nct.astype(jnp.bfloat16), ((0, 0), (0, 0), (0, TP - T))),
        (1, 0, 2)).reshape(C, BTP)

    vmem = pl.BlockSpec(memory_space=pltpu.MemorySpace.VMEM)
    out = pl.pallas_call(
        _make_kernel(B, T, TP),
        out_shape=jax.ShapeDtypeStruct((PLANES, BTP), jnp.bfloat16),
        in_specs=[vmem, vmem],
        out_specs=vmem,
        scratch_shapes=[pltpu.VMEM((PLANES, BTP), jnp.float32)],   # channel-concat buffer
        # 48 MiB: fits v7x's 64 MiB/TC VMEM with headroom; well under v5e/v6e 128 MiB.
        compiler_params=pltpu.CompilerParams(vmem_limit_bytes=48 * 1024 * 1024),
    )(x_cbt, slab)

    return jnp.transpose(out.reshape(PLANES, B, TP)[:, :, :T], (1, 0, 2))


# ------------------------- deterministic parameter init -------------------------
def init_params(key):
    ks = jax.random.split(key, 12)
    nrm = lambda k, shape, s=0.1: (s * jax.random.normal(k, shape)).astype(jnp.float32)
    return dict(
        wr=nrm(ks[0], (PLANES, INPLANES)),                       # residual 1x1, no bias
        w1=nrm(ks[1], (WIDTH * SCALE, INPLANES)),                # conv1
        b1=nrm(ks[2], (WIDTH * SCALE,)),
        g1=1.0 + nrm(ks[3], (WIDTH * SCALE,)),
        be1=nrm(ks[4], (WIDTH * SCALE,)),
        wc=nrm(ks[5], (NUMS, WIDTH, KERNEL_SIZE * WIDTH)),       # stacked taps: col = j*WIDTH + cin
        bc=nrm(ks[6], (NUMS, WIDTH)),
        gc=1.0 + nrm(ks[7], (NUMS, WIDTH)),
        bec=nrm(ks[8], (NUMS, WIDTH)),
        w3=nrm(ks[9], (PLANES, WIDTH * SCALE)),
        b3=nrm(ks[10], (PLANES,)),
        g3=jnp.ones((PLANES,), jnp.float32),
        be3=jnp.zeros((PLANES,), jnp.float32),
        alpha=jnp.ones((PLANES,), jnp.float32),                  # AFMS alpha init = ones
        wfc=nrm(ks[11], (PLANES, PLANES)),                       # nn.Linear weight (out, in)
        bfc=jnp.zeros((PLANES,), jnp.float32),
    )


# ------------------------- independent pure-JAX reference -------------------------
def reference(x_nct, p):
    """Channels-last f32 reference with zero-padded shifts and two-pass BN stats."""
    x = jnp.transpose(x_nct, (0, 2, 1)).astype(jnp.float32)      # (B, T, Cin)
    B, T, _ = x.shape
    hi = jax.lax.Precision.HIGHEST
    mm = lambda a, w: jnp.einsum("btc,oc->bto", a, w, precision=hi)

    def bn(h, gamma, beta):
        mean = jnp.mean(h, axis=(0, 1), keepdims=True)
        var = jnp.mean(jnp.square(h - mean), axis=(0, 1), keepdims=True)
        return (gamma.reshape(1, 1, -1) * (h - mean) * jax.lax.rsqrt(var + BN_EPS)
                + beta.reshape(1, 1, -1))

    def shift_t(a, s):
        if s == 0:
            return a
        z = jnp.zeros((B, abs(s), a.shape[2]), a.dtype)
        return (jnp.concatenate([a[:, s:, :], z], 1) if s > 0
                else jnp.concatenate([z, a[:, :T + s, :]], 1))

    residual = mm(x, p["wr"])
    h = bn(jnp.maximum(mm(x, p["w1"]) + p["b1"], 0.0), p["g1"], p["be1"])

    outs, sp = [], None
    for i in range(NUMS):
        xs = h[:, :, i * WIDTH:(i + 1) * WIDTH]
        sp = xs if i == 0 else sp + xs
        acc = 0.0
        for j in range(KERNEL_SIZE):
            wtap = p["wc"][i][:, j * WIDTH:(j + 1) * WIDTH]      # (Cout, Cin) for tap j
            acc = acc + mm(shift_t(sp, j * DILATION - PAD), wtap)
        sp = bn(jnp.maximum(acc + p["bc"][i], 0.0), p["gc"][i], p["bec"][i])
        outs.append(sp)
    outs.append(h[:, :, NUMS * WIDTH:])
    h = jnp.concatenate(outs, axis=-1)

    h = bn(jnp.maximum(mm(h, p["w3"]) + p["b3"], 0.0), p["g3"], p["be3"])
    h = h + residual

    y = jax.nn.sigmoid(jnp.einsum("bc,oc->bo", jnp.mean(h, axis=1), p["wfc"],
                                  precision=hi) + p["bfc"])
    h = (h + p["alpha"]) * y[:, None, :]
    return jnp.transpose(h, (0, 2, 1))                           # (B, PLANES, T)


# ------------------------- main -------------------------
if __name__ == "__main__":
    B, T = 2, 32
    x_nct = jax.random.normal(jax.random.PRNGKey(0), (B, INPLANES, T), dtype=jnp.float32)
    params = init_params(jax.random.PRNGKey(1))
    slab = pack_params(params)

    # Kernel activation I/O is bf16 (HBM-byte halving); reference sees the same
    # bf16-rounded input in f32 so the only divergence is internal precision and
    # the final bf16 store.
    x_bf = x_nct.astype(jnp.bfloat16)
    out = jax.block_until_ready(jax.jit(bottle2neck)(x_bf, slab))
    ref = jax.block_until_ready(reference(x_bf.astype(jnp.float32), params))

    assert out.shape == (B, PLANES, T)
    err = float(jnp.max(jnp.abs(out.astype(jnp.float32) - ref)))
    assert err < 3e-2, f"kernel/reference mismatch: max abs err = {err}"
    print("KERNEL_OK")
</pallas_src>

<mosaic_0001>
module attributes {stable_mosaic.version = 11 : i64} {
  func.func @kernel(%arg0: memref<8x256xbf16, #tpu.memory_space<vmem>>, %arg1: memref<104x16xf32, #tpu.memory_space<vmem>>, %arg2: memref<16x256xbf16, #tpu.memory_space<vmem>>, %arg3: memref<16x256xf32, #tpu.memory_space<vmem>>) attributes {dimension_semantics = [], scalar_prefetch = 0 : i64, scratch_operands = 1 : i64, tpu.core_type = #tpu.core_type<tc>} {
    %c0 = arith.constant 0 : index
    %c0_0 = arith.constant 0 : index
    %0 = vector.load %arg1[%c0, %c0_0] : memref<104x16xf32, #tpu.memory_space<vmem>>, vector<104x16xf32>
    %c0_1 = arith.constant 0 : index
    %c0_2 = arith.constant 0 : index
    %1 = vector.load %arg0[%c0_1, %c0_2] : memref<8x256xbf16, #tpu.memory_space<vmem>>, vector<8x256xbf16>
    %2 = arith.extf %1 : vector<8x256xbf16> to vector<8x256xf32>
    %3 = tpu.iota {dimensions = array<i32: 1>} : vector<1x128xi32>
    %c32_i32 = arith.constant 32 : i32
    %4 = vector.broadcast %c32_i32 : i32 to vector<1x128xi32>
    %5 = arith.cmpi slt, %3, %4 : vector<1x128xi32>
    %6 = arith.extui %5 : vector<1x128xi1> to vector<1x128xi32>
    %7 = arith.sitofp %6 : vector<1x128xi32> to vector<1x128xf32>
    %8 = tpu.concatenate %7, %7 in 1 : vector<1x128xf32>, vector<1x128xf32> -> vector<1x256xf32>
    %9 = vector.extract_strided_slice %0 {offsets = [0, 0], sizes = [32, 8], strides = [1, 1]} : vector<104x16xf32> to vector<32x8xf32>
    %cst = arith.constant dense<0.000000e+00> : vector<32x256xf32>
    %10 = tpu.matmul %9, %2, %cst {dimension_numbers = #tpu.dot_dimension_numbers<[1], [0], [0], [1], [0, 0, 1, 1], [], []>} : vector<32x8xf32>, vector<8x256xf32>, vector<32x256xf32> -> vector<32x256xf32>
    %11 = vector.extract_strided_slice %10 {offsets = [0, 0], sizes = [16, 256], strides = [1, 1]} : vector<32x256xf32> to vector<16x256xf32>
    %12 = vector.extract_strided_slice %10 {offsets = [16, 0], sizes = [16, 256], strides = [1, 1]} : vector<32x256xf32> to vector<16x256xf32>
    %13 = vector.extract_strided_slice %0 {offsets = [88, 0], sizes = [16, 1], strides = [1, 1]} : vector<104x16xf32> to vector<16x1xf32>
    %14 = vector.broadcast %13 : vector<16x1xf32> to vector<16x256xf32>
    %15 = arith.addf %12, %14 : vector<16x256xf32>
    %cst_3 = arith.constant 0.000000e+00 : f32
    %16 = vector.broadcast %cst_3 : f32 to vector<16x256xf32>
    %17 = arith.maximumf %15, %16 : vector<16x256xf32>
    %18 = vector.extract_strided_slice %0 {offsets = [88, 1], sizes = [16, 1], strides = [1, 1]} : vector<104x16xf32> to vector<16x1xf32>
    %19 = vector.extract_strided_slice %0 {offsets = [88, 2], sizes = [16, 1], strides = [1, 1]} : vector<104x16xf32> to vector<16x1xf32>
    %20 = vector.broadcast %8 : vector<1x256xf32> to vector<16x256xf32>
    %21 = arith.mulf %17, %20 : vector<16x256xf32>
    %cst_4 = arith.constant dense<0.000000e+00> : vector<16xf32>
    %22 = vector.multi_reduction <add>, %21, %cst_4 [1] : vector<16x256xf32> to vector<16xf32>
    %23 = vector.shape_cast %22 : vector<16xf32> to vector<16x1xf32>
    %cst_5 = arith.constant 1.562500e-02 : f32
    %24 = vector.broadcast %cst_5 : f32 to vector<16x1xf32>
    %25 = arith.mulf %23, %24 : vector<16x1xf32>
    %26 = arith.mulf %21, %21 : vector<16x256xf32>
    %cst_6 = arith.constant dense<0.000000e+00> : vector<16xf32>
    %27 = vector.multi_reduction <add>, %26, %cst_6 [1] : vector<16x256xf32> to vector<16xf32>
    %28 = vector.shape_cast %27 : vector<16xf32> to vector<16x1xf32>
    %cst_7 = arith.constant 1.562500e-02 : f32
    %29 = vector.broadcast %cst_7 : f32 to vector<16x1xf32>
    %30 = arith.mulf %28, %29 : vector<16x1xf32>
    %31 = arith.mulf %25, %25 : vector<16x1xf32>
    %32 = arith.subf %30, %31 : vector<16x1xf32>
    %cst_8 = arith.constant 0.000000e+00 : f32
    %33 = vector.broadcast %cst_8 : f32 to vector<16x1xf32>
    %34 = arith.maximumf %32, %33 : vector<16x1xf32>
    %cst_9 = arith.constant 9.99999974E-6 : f32
    %35 = vector.broadcast %cst_9 : f32 to vector<16x1xf32>
    %36 = arith.addf %34, %35 : vector<16x1xf32>
    %37 = math.rsqrt %36 : vector<16x1xf32>
    %38 = arith.mulf %18, %37 : vector<16x1xf32>
    %39 = vector.broadcast %38 : vector<16x1xf32> to vector<16x256xf32>
    %40 = arith.mulf %21, %39 : vector<16x256xf32>
    %41 = arith.mulf %25, %38 : vector<16x1xf32>
    %42 = arith.subf %19, %41 : vector<16x1xf32>
    %43 = vector.broadcast %42 : vector<16x1xf32> to vector<16x256xf32>
    %44 = arith.addf %40, %43 : vector<16x256xf32>
    %45 = vector.broadcast %8 : vector<1x256xf32> to vector<16x256xf32>
    %46 = arith.mulf %44, %45 : vector<16x256xf32>
    %47 = vector.extract_strided_slice %46 {offsets = [0, 0], sizes = [4, 256], strides = [1, 1]} : vector<16x256xf32> to vector<4x256xf32>
    %48 = vector.extract_strided_slice %0 {offsets = [32, 0], sizes = [4, 4], strides = [1, 1]} : vector<104x16xf32> to vector<4x4xf32>
    %c2_i32 = arith.constant 2 : i32
    %49 = tpu.dynamic_rotate %47 by %c2_i32 dim 1 : vector<4x256xf32>, i32 -> vector<4x256xf32>
    %cst_10 = arith.constant dense<0.000000e+00> : vector<4x256xf32>
    %50 = tpu.matmul %48, %49, %cst_10 {dimension_numbers = #tpu.dot_dimension_numbers<[1], [0], [0], [1], [0, 0, 1, 1], [], []>} : vector<4x4xf32>, vector<4x256xf32>, vector<4x256xf32> -> vector<4x256xf32>
    %51 = vector.extract_strided_slice %0 {offsets = [32, 4], sizes = [4, 4], strides = [1, 1]} : vector<104x16xf32> to vector<4x4xf32>
    %cst_11 = arith.constant dense<0.000000e+00> : vector<4x256xf32>
    %52 = tpu.matmul %51, %47, %cst_11 {dimension_numbers = #tpu.dot_dimension_numbers<[1], [0], [0], [1], [0, 0, 1, 1], [], []>} : vector<4x4xf32>, vector<4x256xf32>, vector<4x256xf32> -> vector<4x256xf32>
    %53 = arith.addf %50, %52 : vector<4x256xf32>
    %54 = vector.extract_strided_slice %0 {offsets = [32, 8], sizes = [4, 4], strides = [1, 1]} : vector<104x16xf32> to vector<4x4xf32>
    %c254_i32 = arith.constant 254 : i32
    %55 = tpu.dynamic_rotate %47 by %c254_i32 dim 1 : vector<4x256xf32>, i32 -> vector<4x256xf32>
    %cst_12 = arith.constant dense<0.000000e+00> : vector<4x256xf32>
    %56 = tpu.matmul %54, %55, %cst_12 {dimension_numbers = #tpu.dot_dimension_numbers<[1], [0], [0], [1], [0, 0, 1, 1], [], []>} : vector<4x4xf32>, vector<4x256xf32>, vector<4x256xf32> -> vector<4x256xf32>
    %57 = arith.addf %53, %56 : vector<4x256xf32>
    %58 = vector.extract_strided_slice %0 {offsets = [88, 8], sizes = [4, 1], strides = [1, 1]} : vector<104x16xf32> to vector<4x1xf32>
    %59 = vector.broadcast %58 : vector<4x1xf32> to vector<4x256xf32>
    %60 = arith.addf %57, %59 : vector<4x256xf32>
    %cst_13 = arith.constant 0.000000e+00 : f32
    %61 = vector.broadcast %cst_13 : f32 to vector<4x256xf32>
    %62 = arith.maximumf %60, %61 : vector<4x256xf32>
    %63 = vector.extract_strided_slice %0 {offsets = [88, 9], sizes = [4, 1], strides = [1, 1]} : vector<104x16xf32> to vector<4x1xf32>
    %64 = vector.extract_strided_slice %0 {offsets = [88, 10], sizes = [4, 1], strides = [1, 1]} : vector<104x16xf32> to vector<4x1xf32>
    %65 = vector.broadcast %8 : vector<1x256xf32> to vector<4x256xf32>
    %66 = arith.mulf %62, %65 : vector<4x256xf32>
    %cst_14 = arith.constant dense<0.000000e+00> : vector<4xf32>
    %67 = vector.multi_reduction <add>, %66, %cst_14 [1] : vector<4x256xf32> to vector<4xf32>
    %68 = vector.shape_cast %67 : vector<4xf32> to vector<4x1xf32>
    %cst_15 = arith.constant 1.562500e-02 : f32
    %69 = vector.broadcast %cst_15 : f32 to vector<4x1xf32>
    %70 = arith.mulf %68, %69 : vector<4x1xf32>
    %71 = arith.mulf %66, %66 : vector<4x256xf32>
    %cst_16 = arith.constant dense<0.000000e+00> : vector<4xf32>
    %72 = vector.multi_reduction <add>, %71, %cst_16 [1] : vector<4x256xf32> to vector<4xf32>
    %73 = vector.shape_cast %72 : vector<4xf32> to vector<4x1xf32>
    %cst_17 = arith.constant 1.562500e-02 : f32
    %74 = vector.broadcast %cst_17 : f32 to vector<4x1xf32>
    %75 = arith.mulf %73, %74 : vector<4x1xf32>
    %76 = arith.mulf %70, %70 : vector<4x1xf32>
    %77 = arith.subf %75, %76 : vector<4x1xf32>
    %cst_18 = arith.constant 0.000000e+00 : f32
    %78 = vector.broadcast %cst_18 : f32 to vector<4x1xf32>
    %79 = arith.maximumf %77, %78 : vector<4x1xf32>
    %cst_19 = arith.constant 9.99999974E-6 : f32
    %80 = vector.broadcast %cst_19 : f32 to vector<4x1xf32>
    %81 = arith.addf %79, %80 : vector<4x1xf32>
    %82 = math.rsqrt %81 : vector<4x1xf32>
    %83 = arith.mulf %63, %82 : vector<4x1xf32>
    %84 = vector.broadcast %83 : vector<4x1xf32> to vector<4x256xf32>
    %85 = arith.mulf %66, %84 : vector<4x256xf32>
    %86 = arith.mulf %70, %83 : vector<4x1xf32>
    %87 = arith.subf %64, %86 : vector<4x1xf32>
    %88 = vector.broadcast %87 : vector<4x1xf32> to vector<4x256xf32>
    %89 = arith.addf %85, %88 : vector<4x256xf32>
    %90 = vector.broadcast %8 : vector<1x256xf32> to vector<4x256xf32>
    %91 = arith.mulf %89, %90 : vector<4x256xf32>
    %c0_20 = arith.constant 0 : index
    %c0_21 = arith.constant 0 : index
    %92 = vector.load %arg3[%c0_20, %c0_21] : memref<16x256xf32, #tpu.memory_space<vmem>>, vector<4x256xf32>
    tpu.vector_store %arg3[%c0_20, %c0_21], %91 {strides = array<i32>} : memref<16x256xf32, #tpu.memory_space<vmem>>, vector<4x256xf32>,
    %93 = vector.extract_strided_slice %46 {offsets = [4, 0], sizes = [4, 256], strides = [1, 1]} : vector<16x256xf32> to vector<4x256xf32>
    %94 = arith.addf %91, %93 : vector<4x256xf32>
    %95 = vector.extract_strided_slice %0 {offsets = [40, 0], sizes = [4, 4], strides = [1, 1]} : vector<104x16xf32> to vector<4x4xf32>
    %c2_i32_22 = arith.constant 2 : i32
    %96 = tpu.dynamic_rotate %94 by %c2_i32_22 dim 1 : vector<4x256xf32>, i32 -> vector<4x256xf32>
    %cst_23 = arith.constant dense<0.000000e+00> : vector<4x256xf32>
    %97 = tpu.matmul %95, %96, %cst_23 {dimension_numbers = #tpu.dot_dimension_numbers<[1], [0], [0], [1], [0, 0, 1, 1], [], []>} : vector<4x4xf32>, vector<4x256xf32>, vector<4x256xf32> -> vector<4x256xf32>
    %98 = vector.extract_strided_slice %0 {offsets = [40, 4], sizes = [4, 4], strides = [1, 1]} : vector<104x16xf32> to vector<4x4xf32>
    %cst_24 = arith.constant dense<0.000000e+00> : vector<4x256xf32>
    %99 = tpu.matmul %98, %94, %cst_24 {dimension_numbers = #tpu.dot_dimension_numbers<[1], [0], [0], [1], [0, 0, 1, 1], [], []>} : vector<4x4xf32>, vector<4x256xf32>, vector<4x256xf32> -> vector<4x256xf32>
    %100 = arith.addf %97, %99 : vector<4x256xf32>
    %101 = vector.extract_strided_slice %0 {offsets = [40, 8], sizes = [4, 4], strides = [1, 1]} : vector<104x16xf32> to vector<4x4xf32>
    %c254_i32_25 = arith.constant 254 : i32
    %102 = tpu.dynamic_rotate %94 by %c254_i32_25 dim 1 : vector<4x256xf32>, i32 -> vector<4x256xf32>
    %cst_26 = arith.constant dense<0.000000e+00> : vector<4x256xf32>
    %103 = tpu.matmul %101, %102, %cst_26 {dimension_numbers = #tpu.dot_dimension_numbers<[1], [0], [0], [1], [0, 0, 1, 1], [], []>} : vector<4x4xf32>, vector<4x256xf32>, vector<4x256xf32> -> vector<4x256xf32>
    %104 = arith.addf %100, %103 : vector<4x256xf32>
    %105 = vector.extract_strided_slice %0 {offsets = [92, 8], sizes = [4, 1], strides = [1, 1]} : vector<104x16xf32> to vector<4x1xf32>
    %106 = vector.broadcast %105 : vector<4x1xf32> to vector<4x256xf32>
    %107 = arith.addf %104, %106 : vector<4x256xf32>
    %cst_27 = arith.constant 0.000000e+00 : f32
    %108 = vector.broadcast %cst_27 : f32 to vector<4x256xf32>
    %109 = arith.maximumf %107, %108 : vector<4x256xf32>
    %110 = vector.extract_strided_slice %0 {offsets = [92, 9], sizes = [4, 1], strides = [1, 1]} : vector<104x16xf32> to vector<4x1xf32>
    %111 = vector.extract_strided_slice %0 {offsets = [92, 10], sizes = [4, 1], strides = [1, 1]} : vector<104x16xf32> to vector<4x1xf32>
    %112 = vector.broadcast %8 : vector<1x256xf32> to vector<4x256xf32>
    %113 = arith.mulf %109, %112 : vector<4x256xf32>
    %cst_28 = arith.constant dense<0.000000e+00> : vector<4xf32>
    %114 = vector.multi_reduction <add>, %113, %cst_28 [1] : vector<4x256xf32> to vector<4xf32>
    %115 = vector.shape_cast %114 : vector<4xf32> to vector<4x1xf32>
    %cst_29 = arith.constant 1.562500e-02 : f32
    %116 = vector.broadcast %cst_29 : f32 to vector<4x1xf32>
    %117 = arith.mulf %115, %116 : vector<4x1xf32>
    %118 = arith.mulf %113, %113 : vector<4x256xf32>
    %cst_30 = arith.constant dense<0.000000e+00> : vector<4xf32>
    %119 = vector.multi_reduction <add>, %118, %cst_30 [1] : vector<4x256xf32> to vector<4xf32>
    %120 = vector.shape_cast %119 : vector<4xf32> to vector<4x1xf32>
    %cst_31 = arith.constant 1.562500e-02 : f32
    %121 = vector.broadcast %cst_31 : f32 to vector<4x1xf32>
    %122 = arith.mulf %120, %121 : vector<4x1xf32>
    %123 = arith.mulf %117, %117 : vector<4x1xf32>
    %124 = arith.subf %122, %123 : vector<4x1xf32>
    %cst_32 = arith.constant 0.000000e+00 : f32
    %125 = vector.broadcast %cst_32 : f32 to vector<4x1xf32>
    %126 = arith.maximumf %124, %125 : vector<4x1xf32>
    %cst_33 = arith.constant 9.99999974E-6 : f32
    %127 = vector.broadcast %cst_33 : f32 to vector<4x1xf32>
    %128 = arith.addf %126, %127 : vector<4x1xf32>
    %129 = math.rsqrt %128 : vector<4x1xf32>
    %130 = arith.mulf %110, %129 : vector<4x1xf32>
    %131 = vector.broadcast %130 : vector<4x1xf32> to vector<4x256xf32>
    %132 = arith.mulf %113, %131 : vector<4x256xf32>
    %133 = arith.mulf %117, %130 : vector<4x1xf32>
    %134 = arith.subf %111, %133 : vector<4x1xf32>
    %135 = vector.broadcast %134 : vector<4x1xf32> to vector<4x256xf32>
    %136 = arith.addf %132, %135 : vector<4x256xf32>
    %137 = vector.broadcast %8 : vector<1x256xf32> to vector<4x256xf32>
    %138 = arith.mulf %136, %137 : vector<4x256xf32>
    %c4 = arith.constant 4 : index
    %c0_34 = arith.constant 0 : index
    %139 = vector.load %arg3[%c4, %c0_34] : memref<16x256xf32, #tpu.memory_space<vmem>>, vector<4x256xf32>
    tpu.vector_store %arg3[%c4, %c0_34], %138 {strides = array<i32>} : memref<16x256xf32, #tpu.memory_space<vmem>>, vector<4x256xf32>,
    %140 = vector.extract_strided_slice %46 {offsets = [8, 0], sizes = [4, 256], strides = [1, 1]} : vector<16x256xf32> to vector<4x256xf32>
    %141 = arith.addf %138, %140 : vector<4x256xf32>
    %142 = vector.extract_strided_slice %0 {offsets = [48, 0], sizes = [4, 4], strides = [1, 1]} : vector<104x16xf32> to vector<4x4xf32>
    %c2_i32_35 = arith.constant 2 : i32
    %143 = tpu.dynamic_rotate %141 by %c2_i32_35 dim 1 : vector<4x256xf32>, i32 -> vector<4x256xf32>
    %cst_36 = arith.constant dense<0.000000e+00> : vector<4x256xf32>
    %144 = tpu.matmul %142, %143, %cst_36 {dimension_numbers = #tpu.dot_dimension_numbers<[1], [0], [0], [1], [0, 0, 1, 1], [], []>} : vector<4x4xf32>, vector<4x256xf32>, vector<4x256xf32> -> vector<4x256xf32>
    %145 = vector.extract_strided_slice %0 {offsets = [48, 4], sizes = [4, 4], strides = [1, 1]} : vector<104x16xf32> to vector<4x4xf32>
    %cst_37 = arith.constant dense<0.000000e+00> : vector<4x256xf32>
    %146 = tpu.matmul %145, %141, %cst_37 {dimension_numbers = #tpu.dot_dimension_numbers<[1], [0], [0], [1], [0, 0, 1, 1], [], []>} : vector<4x4xf32>, vector<4x256xf32>, vector<4x256xf32> -> vector<4x256xf32>
    %147 = arith.addf %144, %146 : vector<4x256xf32>
    %148 = vector.extract_strided_slice %0 {offsets = [48, 8], sizes = [4, 4], strides = [1, 1]} : vector<104x16xf32> to vector<4x4xf32>
    %c254_i32_38 = arith.constant 254 : i32
    %149 = tpu.dynamic_rotate %141 by %c254_i32_38 dim 1 : vector<4x256xf32>, i32 -> vector<4x256xf32>
    %cst_39 = arith.constant dense<0.000000e+00> : vector<4x256xf32>
    %150 = tpu.matmul %148, %149, %cst_39 {dimension_numbers = #tpu.dot_dimension_numbers<[1], [0], [0], [1], [0, 0, 1, 1], [], []>} : vector<4x4xf32>, vector<4x256xf32>, vector<4x256xf32> -> vector<4x256xf32>
    %151 = arith.addf %147, %150 : vector<4x256xf32>
    %152 = vector.extract_strided_slice %0 {offsets = [96, 8], sizes = [4, 1], strides = [1, 1]} : vector<104x16xf32> to vector<4x1xf32>
    %153 = vector.broadcast %152 : vector<4x1xf32> to vector<4x256xf32>
    %154 = arith.addf %151, %153 : vector<4x256xf32>
    %cst_40 = arith.constant 0.000000e+00 : f32
    %155 = vector.broadcast %cst_40 : f32 to vector<4x256xf32>
    %156 = arith.maximumf %154, %155 : vector<4x256xf32>
    %157 = vector.extract_strided_slice %0 {offsets = [96, 9], sizes = [4, 1], strides = [1, 1]} : vector<104x16xf32> to vector<4x1xf32>
    %158 = vector.extract_strided_slice %0 {offsets = [96, 10], sizes = [4, 1], strides = [1, 1]} : vector<104x16xf32> to vector<4x1xf32>
    %159 = vector.broadcast %8 : vector<1x256xf32> to vector<4x256xf32>
    %160 = arith.mulf %156, %159 : vector<4x256xf32>
    %cst_41 = arith.constant dense<0.000000e+00> : vector<4xf32>
    %161 = vector.multi_reduction <add>, %160, %cst_41 [1] : vector<4x256xf32> to vector<4xf32>
    %162 = vector.shape_cast %161 : vector<4xf32> to vector<4x1xf32>
    %cst_42 = arith.constant 1.562500e-02 : f32
    %163 = vector.broadcast %cst_42 : f32 to vector<4x1xf32>
    %164 = arith.mulf %162, %163 : vector<4x1xf32>
    %165 = arith.mulf %160, %160 : vector<4x256xf32>
    %cst_43 = arith.constant dense<0.000000e+00> : vector<4xf32>
    %166 = vector.multi_reduction <add>, %165, %cst_43 [1] : vector<4x256xf32> to vector<4xf32>
    %167 = vector.shape_cast %166 : vector<4xf32> to vector<4x1xf32>
    %cst_44 = arith.constant 1.562500e-02 : f32
    %168 = vector.broadcast %cst_44 : f32 to vector<4x1xf32>
    %169 = arith.mulf %167, %168 : vector<4x1xf32>
    %170 = arith.mulf %164, %164 : vector<4x1xf32>
    %171 = arith.subf %169, %170 : vector<4x1xf32>
    %cst_45 = arith.constant 0.000000e+00 : f32
    %172 = vector.broadcast %cst_45 : f32 to vector<4x1xf32>
    %173 = arith.maximumf %171, %172 : vector<4x1xf32>
    %cst_46 = arith.constant 9.99999974E-6 : f32
    %174 = vector.broadcast %cst_46 : f32 to vector<4x1xf32>
    %175 = arith.addf %173, %174 : vector<4x1xf32>
    %176 = math.rsqrt %175 : vector<4x1xf32>
    %177 = arith.mulf %157, %176 : vector<4x1xf32>
    %178 = vector.broadcast %177 : vector<4x1xf32> to vector<4x256xf32>
    %179 = arith.mulf %160, %178 : vector<4x256xf32>
    %180 = arith.mulf %164, %177 : vector<4x1xf32>
    %181 = arith.subf %158, %180 : vector<4x1xf32>
    %182 = vector.broadcast %181 : vector<4x1xf32> to vector<4x256xf32>
    %183 = arith.addf %179, %182 : vector<4x256xf32>
    %184 = vector.broadcast %8 : vector<1x256xf32> to vector<4x256xf32>
    %185 = arith.mulf %183, %184 : vector<4x256xf32>
    %c8 = arith.constant 8 : index
    %c0_47 = arith.constant 0 : index
    %186 = vector.load %arg3[%c8, %c0_47] : memref<16x256xf32, #tpu.memory_space<vmem>>, vector<4x256xf32>
    tpu.vector_store %arg3[%c8, %c0_47], %185 {strides = array<i32>} : memref<16x256xf32, #tpu.memory_space<vmem>>, vector<4x256xf32>,
    %187 = vector.extract_strided_slice %46 {offsets = [12, 0], sizes = [4, 256], strides = [1, 1]} : vector<16x256xf32> to vector<4x256xf32>
    %c12 = arith.constant 12 : index
    %c0_48 = arith.constant 0 : index
    %188 = vector.load %arg3[%c12, %c0_48] : memref<16x256xf32, #tpu.memory_space<vmem>>, vector<4x256xf32>
    tpu.vector_store %arg3[%c12, %c0_48], %187 {strides = array<i32>} : memref<16x256xf32, #tpu.memory_space<vmem>>, vector<4x256xf32>,
    %189 = vector.extract_strided_slice %0 {offsets = [56, 0], sizes = [16, 16], strides = [1, 1]} : vector<104x16xf32> to vector<16x16xf32>
    %c0_49 = arith.constant 0 : index
    %c0_50 = arith.constant 0 : index
    %190 = vector.load %arg3[%c0_49, %c0_50] : memref<16x256xf32, #tpu.memory_space<vmem>>, vector<16x256xf32>
    %cst_51 = arith.constant dense<0.000000e+00> : vector<16x256xf32>
    %191 = tpu.matmul %189, %190, %cst_51 {dimension_numbers = #tpu.dot_dimension_numbers<[1], [0], [0], [1], [0, 0, 1, 1], [], []>} : vector<16x16xf32>, vector<16x256xf32>, vector<16x256xf32> -> vector<16x256xf32>
    %192 = vector.extract_strided_slice %0 {offsets = [88, 3], sizes = [16, 1], strides = [1, 1]} : vector<104x16xf32> to vector<16x1xf32>
    %193 = vector.broadcast %192 : vector<16x1xf32> to vector<16x256xf32>
    %194 = arith.addf %191, %193 : vector<16x256xf32>
    %cst_52 = arith.constant 0.000000e+00 : f32
    %195 = vector.broadcast %cst_52 : f32 to vector<16x256xf32>
    %196 = arith.maximumf %194, %195 : vector<16x256xf32>
    %197 = vector.extract_strided_slice %0 {offsets = [88, 4], sizes = [16, 1], strides = [1, 1]} : vector<104x16xf32> to vector<16x1xf32>
    %198 = vector.extract_strided_slice %0 {offsets = [88, 5], sizes = [16, 1], strides = [1, 1]} : vector<104x16xf32> to vector<16x1xf32>
    %199 = vector.broadcast %8 : vector<1x256xf32> to vector<16x256xf32>
    %200 = arith.mulf %196, %199 : vector<16x256xf32>
    %cst_53 = arith.constant dense<0.000000e+00> : vector<16xf32>
    %201 = vector.multi_reduction <add>, %200, %cst_53 [1] : vector<16x256xf32> to vector<16xf32>
    %202 = vector.shape_cast %201 : vector<16xf32> to vector<16x1xf32>
    %cst_54 = arith.constant 1.562500e-02 : f32
    %203 = vector.broadcast %cst_54 : f32 to vector<16x1xf32>
    %204 = arith.mulf %202, %203 : vector<16x1xf32>
    %205 = arith.mulf %200, %200 : vector<16x256xf32>
    %cst_55 = arith.constant dense<0.000000e+00> : vector<16xf32>
    %206 = vector.multi_reduction <add>, %205, %cst_55 [1] : vector<16x256xf32> to vector<16xf32>
    %207 = vector.shape_cast %206 : vector<16xf32> to vector<16x1xf32>
    %cst_56 = arith.constant 1.562500e-02 : f32
    %208 = vector.broadcast %cst_56 : f32 to vector<16x1xf32>
    %209 = arith.mulf %207, %208 : vector<16x1xf32>
    %210 = arith.mulf %204, %204 : vector<16x1xf32>
    %211 = arith.subf %209, %210 : vector<16x1xf32>
    %cst_57 = arith.constant 0.000000e+00 : f32
    %212 = vector.broadcast %cst_57 : f32 to vector<16x1xf32>
    %213 = arith.maximumf %211, %212 : vector<16x1xf32>
    %cst_58 = arith.constant 9.99999974E-6 : f32
    %214 = vector.broadcast %cst_58 : f32 to vector<16x1xf32>
    %215 = arith.addf %213, %214 : vector<16x1xf32>
    %216 = math.rsqrt %215 : vector<16x1xf32>
    %217 = arith.mulf %197, %216 : vector<16x1xf32>
    %218 = vector.broadcast %217 : vector<16x1xf32> to vector<16x256xf32>
    %219 = arith.mulf %200, %218 : vector<16x256xf32>
    %220 = arith.mulf %204, %217 : vector<16x1xf32>
    %221 = arith.subf %198, %220 : vector<16x1xf32>
    %222 = vector.broadcast %221 : vector<16x1xf32> to vector<16x256xf32>
    %223 = arith.addf %219, %222 : vector<16x256xf32>
    %224 = vector.broadcast %8 : vector<1x256xf32> to vector<16x256xf32>
    %225 = arith.mulf %223, %224 : vector<16x256xf32>
    %226 = arith.addf %225, %11 : vector<16x256xf32>
    %227 = vector.extract_strided_slice %0 {offsets = [72, 0], sizes = [16, 16], strides = [1, 1]} : vector<104x16xf32> to vector<16x16xf32>
    %cst_59 = arith.constant dense<0.000000e+00> : vector<16x256xf32>
    %228 = tpu.matmul %227, %226, %cst_59 {dimension_numbers = #tpu.dot_dimension_numbers<[1], [0], [0], [1], [0, 0, 1, 1], [], []>} : vector<16x16xf32>, vector<16x256xf32>, vector<16x256xf32> -> vector<16x256xf32>
    %229 = vector.extract_strided_slice %0 {offsets = [88, 6], sizes = [16, 1], strides = [1, 1]} : vector<104x16xf32> to vector<16x1xf32>
    %230 = vector.extract_strided_slice %0 {offsets = [88, 7], sizes = [16, 1], strides = [1, 1]} : vector<104x16xf32> to vector<16x1xf32>
    %231 = vector.extract_strided_slice %228 {offsets = [0, 0], sizes = [16, 128], strides = [1, 1]} : vector<16x256xf32> to vector<16x128xf32>
    %cst_60 = arith.constant dense<0.000000e+00> : vector<16xf32>
    %232 = vector.multi_reduction <add>, %231, %cst_60 [1] : vector<16x128xf32> to vector<16xf32>
    %233 = vector.shape_cast %232 : vector<16xf32> to vector<16x1xf32>
    %cst_61 = arith.constant 3.125000e-02 : f32
    %234 = vector.broadcast %cst_61 : f32 to vector<16x1xf32>
    %235 = arith.mulf %233, %234 : vector<16x1xf32>
    %236 = arith.addf %235, %230 : vector<16x1xf32>
    %237 = arith.negf %236 : vector<16x1xf32>
    %238 = math.exp %237 : vector<16x1xf32>
    %cst_62 = arith.constant 1.000000e+00 : f32
    %239 = vector.broadcast %cst_62 : f32 to vector<16x1xf32>
    %240 = arith.addf %239, %238 : vector<16x1xf32>
    %241 = arith.divf %239, %240 : vector<16x1xf32>
    %242 = vector.extract_strided_slice %226 {offsets = [0, 0], sizes = [16, 128], strides = [1, 1]} : vector<16x256xf32> to vector<16x128xf32>
    %243 = vector.broadcast %229 : vector<16x1xf32> to vector<16x128xf32>
    %244 = arith.addf %242, %243 : vector<16x128xf32>
    %245 = vector.broadcast %241 : vector<16x1xf32> to vector<16x128xf32>
    %246 = arith.mulf %244, %245 : vector<16x128xf32>
    %247 = arith.truncf %246 : vector<16x128xf32> to vector<16x128xbf16>
    %c0_63 = arith.constant 0 : index
    %c0_64 = arith.constant 0 : index
    %248 = vector.load %arg2[%c0_63, %c0_64] : memref<16x256xbf16, #tpu.memory_space<vmem>>, vector<16x128xbf16>
    tpu.vector_store %arg2[%c0_63, %c0_64], %247 {strides = array<i32>} : memref<16x256xbf16, #tpu.memory_space<vmem>>, vector<16x128xbf16>,
    %249 = vector.extract_strided_slice %228 {offsets = [0, 128], sizes = [16, 128], strides = [1, 1]} : vector<16x256xf32> to vector<16x128xf32>
    %cst_65 = arith.constant dense<0.000000e+00> : vector<16xf32>
    %250 = vector.multi_reduction <add>, %249, %cst_65 [1] : vector<16x128xf32> to vector<16xf32>
    %251 = vector.shape_cast %250 : vector<16xf32> to vector<16x1xf32>
    %cst_66 = arith.constant 3.125000e-02 : f32
    %252 = vector.broadcast %cst_66 : f32 to vector<16x1xf32>
    %253 = arith.mulf %251, %252 : vector<16x1xf32>
    %254 = arith.addf %253, %230 : vector<16x1xf32>
    %255 = arith.negf %254 : vector<16x1xf32>
    %256 = math.exp %255 : vector<16x1xf32>
    %cst_67 = arith.constant 1.000000e+00 : f32
    %257 = vector.broadcast %cst_67 : f32 to vector<16x1xf32>
    %258 = arith.addf %257, %256 : vector<16x1xf32>
    %259 = arith.divf %257, %258 : vector<16x1xf32>
    %260 = vector.extract_strided_slice %226 {offsets = [0, 128], sizes = [16, 128], strides = [1, 1]} : vector<16x256xf32> to vector<16x128xf32>
    %261 = vector.broadcast %229 : vector<16x1xf32> to vector<16x128xf32>
    %262 = arith.addf %260, %261 : vector<16x128xf32>
    %263 = vector.broadcast %259 : vector<16x1xf32> to vector<16x128xf32>
    %264 = arith.mulf %262, %263 : vector<16x128xf32>
    %265 = arith.truncf %264 : vector<16x128xf32> to vector<16x128xbf16>
    %c0_68 = arith.constant 0 : index
    %c128 = arith.constant 128 : index
    %266 = vector.load %arg2[%c0_68, %c128] : memref<16x256xbf16, #tpu.memory_space<vmem>>, vector<16x128xbf16>
    tpu.vector_store %arg2[%c0_68, %c128], %265 {strides = array<i32>} : memref<16x256xbf16, #tpu.memory_space<vmem>>, vector<16x128xbf16>,
    return
  }
}

</mosaic_0001>

<llo_original>
// kernel: bottle2neck.1
$region0: #{bottle2neck.1}
  #allocation0 [shape = 'u32[]', space=smem, size = 0x4, offset = 0x4, fixed_abs, tag = 'smem constant byte address 0x4 - core index']
  #allocation1 [shape = 'u32[144,128]{1,0:T(1,128)}', space=vmem, size = 0x12000, scoped, tag = 'internal scratch']
  #allocation2 [shape = 'f32[16,256]{1,0:T(8,128)}', space=vmem, size = 0x4000, scoped, tag = 'scratch operand']
  %s0 = inlined_call_operand.vmem [shape: bf16[8,256], index: 0, kind: input, shape index: {}]
  %s1 = inlined_call_operand.vmem [shape: f32[104,16], index: 1, kind: input, shape index: {}]
  %s2 = inlined_call_operand.vmem [shape: bf16[16,256], index: 2, kind: output, shape index: {}]
  %s3 = sld [smem:[#allocation0]]
  $region18: #{bottle2neck.1} parent=0
    _
  %s5 = ssub.s32 1, %s3
  %s6 = scalar_select 0, %s5, %s3
  // Predicated region
  $region2: #{bottle2neck.1} parent=0 // pred_check
    _
  $region3: #{bottle2neck.1} parent=0 // pred_check_branch
    %8 = sbr.rel (0) target = $region5
  $region4: #{bottle2neck.1} parent=0 // pred_region
    _
  $region5: #{bottle2neck.1} parent=0 // pred_fallthru
    _
  // Predicated region
  $region6: #{bottle2neck.1} parent=0 // pred_check
    _
  $region7: #{bottle2neck.1} parent=0 // pred_check_branch
    %10 = sbr.rel (0) target = $region9
  $region8: #{bottle2neck.1} parent=0 // pred_region
    _
  $region9: #{bottle2neck.1} parent=0 // pred_fallthru
    _
  %v11 = vld [vmem:[%s1] sm:$0xff]
  %v12 = vld [vmem:[%s1 + $0x8] sm:$0xff]
  %v13 = vld [vmem:[%s1 + $0x10] sm:$0xff]
  %v14 = vld [vmem:[%s1 + $0x18] sm:$0xff]
  %v15 = vld [vmem:[%s1 + $0x20] sm:$0xff]
  %v16 = vld [vmem:[%s1 + $0x28] sm:$0xff]
  %v17 = vld [vmem:[%s1 + $0x30] sm:$0xff]
  %v18 = vld [vmem:[%s1 + $0x38] sm:$0xff]
  %v19 = vld [vmem:[%s1 + $0x40] sm:$0xff]
  %v20 = vld [vmem:[%s1 + $0x48] sm:$0xff]
  %v21 = vld [vmem:[%s1 + $0x50] sm:$0xff]
  %v22 = vld [vmem:[%s1 + $0x58] sm:$0xff]
  %v23 = vld [vmem:[%s1 + $0x60] sm:$0xff]
  %v24 = vld [vmem:[%s0] sm:$0xff]
  %v25 = vunpack.c.l.bf16 %v24
  %v26 = vunpack.c.h.bf16 %v24
  %v27 = vlaneseq
  %v28 = vand.u32 %v27, 127
  %vm29 = vcmp.lt.s32.totalorder %v28, 32
  %v30 = vsel %vm29, 1, 0
  %v31 = vcvt.s32.f32 %v30
  %vm32 = vcmask 64512
  %v34 = vsel %vm32, %v11, 0
  %v37 = vsel %vm32, %v12, 0
  %v40 = vsel %vm32, %v13, 0
  %v43 = vsel %vm32, %v14, 0
  %45 = vmatprep.subr.mxu0 0.0
  %46 = vmatpush1.msra.mxu0 0.0
  %47 = vmatprep.subr.mxu0 0.0
  %48 = vmatpush1.msra.mxu0 0.0
  %49 = vmatprep.subr.mxu0 0.0
  %50 = vmatpush1.msra.mxu0 0.0
  %51 = vmatprep.subr.mxu0 0.0
  %52 = vmatpush1.msra.mxu0 0.0
  %53 = vmatprep.subr.mxu0 0.0
  %54 = vmatpush1.msra.mxu0 0.0
  %55 = vmatprep.subr.mxu0 0.0
  %56 = vmatpush1.msra.mxu0 0.0
  %57 = vmatprep.subr.mxu0 0.0
  %58 = vmatpush1.msra.mxu0 0.0
  %59 = vmatprep.subr.mxu0 0.0
  %60 = vmatpush1.msra.mxu0 0.0
  %61 = vmatprep.subr.mxu0 0.0
  %62 = vmatpush1.msra.mxu0 0.0
  %63 = vmatprep.subr.mxu0 0.0
  %64 = vmatpush1.msra.mxu0 0.0
  %65 = vmatprep.subr.mxu0 0.0
  %66 = vmatpush1.msra.mxu0 0.0
  %67 = vmatprep.subr.mxu0 0.0
  %68 = vmatpush1.msra.mxu0 0.0
  %69 = vmatprep.subr.mxu0 0.0
  %70 = vmatpush1.msra.mxu0 0.0
  %71 = vmatprep.subr.mxu0 0.0
  %72 = vmatpush1.msra.mxu0 0.0
  %73 = vmatprep.subr.mxu0 0.0
  %74 = vmatpush1.msra.mxu0 0.0
  %75 = vmatprep.subr.mxu0 %v26
  %76 = vmatpush1.msra.mxu0 %v25
  %77 = vmatprep.subr.mxu0 0.0
  %78 = vmatpush2.msra.mxu0 0.0
  %79 = vmatprep.subr.mxu0 0.0
  %80 = vmatpush2.msra.mxu0 0.0
  %81 = vmatprep.subr.mxu0 0.0
  %82 = vmatpush2.msra.mxu0 0.0
  %83 = vmatprep.subr.mxu0 0.0
  %84 = vmatpush2.msra.mxu0 0.0
  %85 = vmatprep.subr.mxu0 0.0
  %86 = vmatpush2.msra.mxu0 0.0
  %87 = vmatprep.subr.mxu0 0.0
  %88 = vmatpush2.msra.mxu0 0.0
  %89 = vmatprep.subr.mxu0 0.0
  %90 = vmatpush2.msra.mxu0 0.0
  %91 = vmatprep.subr.mxu0 0.0
  %92 = vmatpush2.msra.mxu0 0.0
  %93 = vmatprep.subr.mxu0 0.0
  %94 = vmatpush2.msra.mxu0 0.0
  %95 = vmatprep.subr.mxu0 0.0
  %96 = vmatpush2.msra.mxu0 0.0
  %97 = vmatprep.subr.mxu0 0.0
  %98 = vmatpush2.msra.mxu0 0.0
  %99 = vmatprep.subr.mxu0 0.0
  %100 = vmatpush2.msra.mxu0 0.0
  %101 = vmatprep.subr.mxu0 0.0
  %102 = vmatpush2.msra.mxu0 0.0
  %103 = vmatprep.subr.mxu0 0.0
  %104 = vmatpush2.msra.mxu0 0.0
  %105 = vmatprep.subr.mxu0 0.0
  %106 = vmatpush2.msra.mxu0 0.0
  %107 = vmatprep.subr.mxu0 0.0
  %108 = vmatpush2.msra.mxu0 0.0
  %109 = vmatprep.mubr.f32.mxu0 0.0
  %110 = vmatmul.mubr.f32.gmra.mxu0 %v34
  %v111 = vpop.f32.mrf.mxu0
  %v112 = vadd.f32 0.0, %v111
  %v113 = vpop.f32.mrf.mxu0
  %v114 = vadd.f32 0.0, %v113
  %115 = vmatprep.mubr.f32.mxu0 0.0
  %116 = vmatmul.mubr.f32.gmra.mxu0 %v37
  %v117 = vpop.f32.mrf.mxu0
  %v118 = vadd.f32 0.0, %v117
  %v119 = vpop.f32.mrf.mxu0
  %v120 = vadd.f32 0.0, %v119
  %121 = vmatprep.mubr.f32.mxu0 0.0
  %122 = vmatmul.mubr.f32.gmra.mxu0 %v40
  %v123 = vpop.f32.mrf.mxu0
  %v124 = vadd.f32 0.0, %v123
  %v125 = vpop.f32.mrf.mxu0
  %v126 = vadd.f32 0.0, %v125
  %127 = vmatprep.mubr.f32.mxu0 0.0
  %128 = vmatmul.mubr.f32.gmra.mxu0 %v43
  %v129 = vpop.f32.mrf.mxu0
  %v130 = vadd.f32 0.0, %v129
  %v131 = vpop.f32.mrf.mxu0
  %v132 = vadd.f32 0.0, %v131
  %133 = vdwg.mxu0
  %135 = vset.pattern.permute.xlu0 0
  %136 = vperm.xlu0 %135, %v22
  %v137 = vpop.permute.xlu0 %136
  %140 = vset.pattern.permute.xlu0 0
  %141 = vperm.xlu0 %140, %v23
  %v142 = vpop.permute.xlu0 %141
  %v144 = vadd.f32 %v124, %v137
  %v145 = vadd.f32 %v126, %v137
  %v146 = vadd.f32 %v130, %v142
  %v147 = vadd.f32 %v132, %v142
  %v148 = vmax.f32 %v144, 0.0
  %v149 = vmax.f32 %v145, 0.0
  %v150 = vmax.f32 %v146, 0.0
  %v151 = vmax.f32 %v147, 0.0
  %v152 = vlaneseq
  %v153 = vshrl.u32 %v152, 7
  %v154 = vsub.s32 0, %v153
  %v155 = vrot.slane %v31, %v154
  %v156 = vmul.f32 %v148, %v155
  %v157 = vmul.f32 %v149, %v155
  %v158 = vmul.f32 %v150, %v155
  %v159 = vmul.f32 %v151, %v155
  %v160 = vadd.f32 %v156, %v157
  %161 = vadd.xlane.f32.xlu0 %v160
  %v162 = vpop.xlane.xlu0 %161
  %v163 = vadd.f32 %v158, %v159
  %164 = vadd.xlane.f32.xlu0 %v163
  %v165 = vpop.xlane.xlu0 %164
  %v166 = vmul.f32 %v162, 0.015625
  %v167 = vmul.f32 %v165, 0.015625
  %v168 = vmul.f32 %v156, %v156
  %v169 = vmul.f32 %v157, %v157
  %v170 = vmul.f32 %v158, %v158
  %v171 = vmul.f32 %v159, %v159
  %v172 = vadd.f32 %v168, %v169
  %173 = vadd.xlane.f32.xlu0 %v172
  %v174 = vpop.xlane.xlu0 %173
  %v175 = vadd.f32 %v170, %v171
  %176 = vadd.xlane.f32.xlu0 %v175
  %v177 = vpop.xlane.xlu0 %176
  %v178 = vmul.f32 %v174, 0.015625
  %v179 = vmul.f32 %v177, 0.015625
  %v180 = vmul.f32 %v166, %v166
  %v181 = vmul.f32 %v167, %v167
  %v182 = vsub.f32 %v178, %v180
  %v183 = vsub.f32 %v179, %v181
  %v184 = vmax.f32 %v182, 0.0
  %v185 = vmax.f32 %v183, 0.0
  %v186 = vadd.f32 %v184, 1e-05
  %v187 = vadd.f32 %v185, 1e-05
  %v188 = vrsqrt.pop %v186
  %v189 = vrsqrt.pop %v187
  %v190 = vmul.f32 %v22, %v188
  %v191 = vmul.f32 %v23, %v189
  %193 = vset.pattern.permute.xlu0 1
  %194 = vperm.xlu0 %193, %v190
  %v195 = vpop.permute.xlu0 %194
  %198 = vset.pattern.permute.xlu0 1
  %199 = vperm.xlu0 %198, %v191
  %v200 = vpop.permute.xlu0 %199
  %v202 = vmul.f32 %v156, %v195
  %v203 = vmul.f32 %v157, %v195
  %v204 = vmul.f32 %v158, %v200
  %v205 = vmul.f32 %v159, %v200
  %v206 = vmul.f32 %v166, %v190
  %v207 = vmul.f32 %v167, %v191
  %210 = vrot.lane.b32.xlu0 %v206, 1
  %v211 = vpop.permute.xlu0 %210
  %212 = vrot.lane.b32.xlu0 %v207, 1
  %v213 = vpop.permute.xlu0 %212
  %v216 = vsub.f32 %v22, %v211
  %v217 = vsub.f32 %v23, %v213
  %219 = vset.pattern.permute.xlu0 2
  %220 = vperm.xlu0 %219, %v216
  %v221 = vpop.permute.xlu0 %220
  %224 = vset.pattern.permute.xlu0 2
  %225 = vperm.xlu0 %224, %v217
  %v226 = vpop.permute.xlu0 %225
  %v228 = vadd.f32 %v202, %v221
  %v229 = vadd.f32 %v203, %v221
  %v230 = vadd.f32 %v204, %v226
  %v231 = vadd.f32 %v205, %v226
  %v232 = vmul.f32 %v228, %v155
  %v233 = vmul.f32 %v229, %v155
  %v234 = vmul.f32 %v230, %v155
  %v235 = vmul.f32 %v231, %v155
  %236 = vrot.lane.b32.xlu0 %v232, 2
  %v237 = vpop.permute.xlu0 %236
  %238 = vrot.lane.b32.xlu0 %v233, 2
  %v239 = vpop.permute.xlu0 %238
  %vm240 = vcmp.lt.s32.totalorder %v28, 2
  %v241 = vsel %vm240, %v237, %v239
  %v242 = vsel %vm240, %v239, %v237
  %244 = vrot.lane.b32.xlu0 %v15, 124
  %v245 = vpop.permute.xlu0 %244
  %vm246 = vcmask 31744
  %v247 = vsel %vm246, %v245, 0
  %vm249 = vcmask 1043456
  %v251 = vsel %vm249, %v232, 0
  %v254 = vsel %vm249, %v233, 0
  %256 = vmatprep.subr.mxu0 0.0
  %257 = vmatpush1.msra.mxu0 0.0
  %258 = vmatprep.subr.mxu0 0.0
  %259 = vmatpush1.msra.mxu0 0.0
  %260 = vmatprep.subr.mxu0 0.0
  %261 = vmatpush1.msra.mxu0 0.0
  %262 = vmatprep.subr.mxu0 0.0
  %263 = vmatpush1.msra.mxu0 0.0
  %264 = vmatprep.subr.mxu0 0.0
  %265 = vmatpush1.msra.mxu0 0.0
  %266 = vmatprep.subr.mxu0 0.0
  %267 = vmatpush1.msra.mxu0 0.0
  %268 = vmatprep.subr.mxu0 0.0
  %269 = vmatpush1.msra.mxu0 0.0
  %270 = vmatprep.subr.mxu0 0.0
  %271 = vmatpush1.msra.mxu0 0.0
  %272 = vmatprep.subr.mxu0 0.0
  %273 = vmatpush1.msra.mxu0 0.0
  %274 = vmatprep.subr.mxu0 0.0
  %275 = vmatpush1.msra.mxu0 0.0
  %276 = vmatprep.subr.mxu0 0.0
  %277 = vmatpush1.msra.mxu0 0.0
  %278 = vmatprep.subr.mxu0 0.0
  %279 = vmatpush1.msra.mxu0 0.0
  %280 = vmatprep.subr.mxu0 0.0
  %281 = vmatpush1.msra.mxu0 0.0
  %282 = vmatprep.subr.mxu0 0.0
  %283 = vmatpush1.msra.mxu0 0.0
  %284 = vmatprep.subr.mxu0 0.0
  %285 = vmatpush1.msra.mxu0 0.0
  %286 = vmatprep.subr.mxu0 %v254
  %287 = vmatpush1.msra.mxu0 %v251
  %288 = vmatprep.subr.mxu0 0.0
  %289 = vmatpush2.msra.mxu0 0.0
  %290 = vmatprep.subr.mxu0 0.0
  %291 = vmatpush2.msra.mxu0 0.0
  %292 = vmatprep.subr.mxu0 0.0
  %293 = vmatpush2.msra.mxu0 0.0
  %294 = vmatprep.subr.mxu0 0.0
  %295 = vmatpush2.msra.mxu0 0.0
  %296 = vmatprep.subr.mxu0 0.0
  %297 = vmatpush2.msra.mxu0 0.0
  %298 = vmatprep.subr.mxu0 0.0
  %299 = vmatpush2.msra.mxu0 0.0
  %300 = vmatprep.subr.mxu0 0.0
  %301 = vmatpush2.msra.mxu0 0.0
  %302 = vmatprep.subr.mxu0 0.0
  %303 = vmatpush2.msra.mxu0 0.0
  %304 = vmatprep.subr.mxu0 0.0
  %305 = vmatpush2.msra.mxu0 0.0
  %306 = vmatprep.subr.mxu0 0.0
  %307 = vmatpush2.msra.mxu0 0.0
  %308 = vmatprep.subr.mxu0 0.0
  %309 = vmatpush2.msra.mxu0 0.0
  %310 = vmatprep.subr.mxu0 0.0
  %311 = vmatpush2.msra.mxu0 0.0
  %312 = vmatprep.subr.mxu0 0.0
  %313 = vmatpush2.msra.mxu0 0.0
  %314 = vmatprep.subr.mxu0 0.0
  %315 = vmatpush2.msra.mxu0 0.0
  %316 = vmatprep.subr.mxu0 0.0
  %317 = vmatpush2.msra.mxu0 0.0
  %318 = vmatprep.subr.mxu0 0.0
  %319 = vmatpush2.msra.mxu0 0.0
  %320 = vmatprep.mubr.f32.mxu0 0.0
  %321 = vmatmul.mubr.f32.gmra.mxu0 %v247
  %v322 = vpop.f32.mrf.mxu0
  %v323 = vadd.f32 0.0, %v322
  %v324 = vpop.f32.mrf.mxu0
  %v325 = vadd.f32 0.0, %v324
  %326 = vdwg.mxu0
  %v327 = vsel %vm246, %v15, 0
  %v330 = vsel %vm249, %v242, 0
  %v333 = vsel %vm249, %v241, 0
  %335 = vmatprep.subr.mxu0 0.0
  %336 = vmatpush1.msra.mxu0 0.0
  %337 = vmatprep.subr.mxu0 0.0
  %338 = vmatpush1.msra.mxu0 0.0
  %339 = vmatprep.subr.mxu0 0.0
  %340 = vmatpush1.msra.mxu0 0.0
  %341 = vmatprep.subr.mxu0 0.0
  %342 = vmatpush1.msra.mxu0 0.0
  %343 = vmatprep.subr.mxu0 0.0
  %344 = vmatpush1.msra.mxu0 0.0
  %345 = vmatprep.subr.mxu0 0.0
  %346 = vmatpush1.msra.mxu0 0.0
  %347 = vmatprep.subr.mxu0 0.0
  %348 = vmatpush1.msra.mxu0 0.0
  %349 = vmatprep.subr.mxu0 0.0
  %350 = vmatpush1.msra.mxu0 0.0
  %351 = vmatprep.subr.mxu0 0.0
  %352 = vmatpush1.msra.mxu0 0.0
  %353 = vmatprep.subr.mxu0 0.0
  %354 = vmatpush1.msra.mxu0 0.0
  %355 = vmatprep.subr.mxu0 0.0
  %356 = vmatpush1.msra.mxu0 0.0
  %357 = vmatprep.subr.mxu0 0.0
  %358 = vmatpush1.msra.mxu0 0.0
  %359 = vmatprep.subr.mxu0 0.0
  %360 = vmatpush1.msra.mxu0 0.0
  %361 = vmatprep.subr.mxu0 0.0
  %362 = vmatpush1.msra.mxu0 0.0
  %363 = vmatprep.subr.mxu0 0.0
  %364 = vmatpush1.msra.mxu0 0.0
  %365 = vmatprep.subr.mxu0 %v333
  %366 = vmatpush1.msra.mxu0 %v330
  %367 = vmatprep.subr.mxu0 0.0
  %368 = vmatpush2.msra.mxu0 0.0
  %369 = vmatprep.subr.mxu0 0.0
  %370 = vmatpush2.msra.mxu0 0.0
  %371 = vmatprep.subr.mxu0 0.0
  %372 = vmatpush2.msra.mxu0 0.0
  %373 = vmatprep.subr.mxu0 0.0
  %374 = vmatpush2.msra.mxu0 0.0
  %375 = vmatprep.subr.mxu0 0.0
  %376 = vmatpush2.msra.mxu0 0.0
  %377 = vmatprep.subr.mxu0 0.0
  %378 = vmatpush2.msra.mxu0 0.0
  %379 = vmatprep.subr.mxu0 0.0
  %380 = vmatpush2.msra.mxu0 0.0
  %381 = vmatprep.subr.mxu0 0.0
  %382 = vmatpush2.msra.mxu0 0.0
  %383 = vmatprep.subr.mxu0 0.0
  %384 = vmatpush2.msra.mxu0 0.0
  %385 = vmatprep.subr.mxu0 0.0
  %386 = vmatpush2.msra.mxu0 0.0
  %387 = vmatprep.subr.mxu0 0.0
  %388 = vmatpush2.msra.mxu0 0.0
  %389 = vmatprep.subr.mxu0 0.0
  %390 = vmatpush2.msra.mxu0 0.0
  %391 = vmatprep.subr.mxu0 0.0
  %392 = vmatpush2.msra.mxu0 0.0
  %393 = vmatprep.subr.mxu0 0.0
  %394 = vmatpush2.msra.mxu0 0.0
  %395 = vmatprep.subr.mxu0 0.0
  %396 = vmatpush2.msra.mxu0 0.0
  %397 = vmatprep.subr.mxu0 0.0
  %398 = vmatpush2.msra.mxu0 0.0
  %399 = vmatprep.mubr.f32.mxu0 0.0
  %400 = vmatmul.mubr.f32.gmra.mxu0 %v327
  %v401 = vpop.f32.mrf.mxu0
  %v402 = vadd.f32 %v323, %v401
  %v403 = vpop.f32.mrf.mxu0
  %v404 = vadd.f32 %v325, %v403
  %405 = vdwg.mxu0
  %406 = vrot.lane.b32.xlu0 %v232, 126
  %v407 = vpop.permute.xlu0 %406
  %408 = vrot.lane.b32.xlu0 %v233, 126
  %v409 = vpop.permute.xlu0 %408
  %vm410 = vcmp.lt.s32.totalorder %v28, 126
  %v411 = vsel %vm410, %v407, %v409
  %v412 = vsel %vm410, %v409, %v407
  %413 = vrot.lane.b32.xlu0 %v15, 120
  %v414 = vpop.permute.xlu0 %413
  %v415 = vsel %vm246, %v414, 0
  %v418 = vsel %vm249, %v411, 0
  %v421 = vsel %vm249, %v412, 0
  %423 = vmatprep.subr.mxu0 0.0
  %424 = vmatpush1.msra.mxu0 0.0
  %425 = vmatprep.subr.mxu0 0.0
  %426 = vmatpush1.msra.mxu0 0.0
  %427 = vmatprep.subr.mxu0 0.0
  %428 = vmatpush1.msra.mxu0 0.0
  %429 = vmatprep.subr.mxu0 0.0
  %430 = vmatpush1.msra.mxu0 0.0
  %431 = vmatprep.subr.mxu0 0.0
  %432 = vmatpush1.msra.mxu0 0.0
  %433 = vmatprep.subr.mxu0 0.0
  %434 = vmatpush1.msra.mxu0 0.0
  %435 = vmatprep.subr.mxu0 0.0
  %436 = vmatpush1.msra.mxu0 0.0
  %437 = vmatprep.subr.mxu0 0.0
  %438 = vmatpush1.msra.mxu0 0.0
  %439 = vmatprep.subr.mxu0 0.0
  %440 = vmatpush1.msra.mxu0 0.0
  %441 = vmatprep.subr.mxu0 0.0
  %442 = vmatpush1.msra.mxu0 0.0
  %443 = vmatprep.subr.mxu0 0.0
  %444 = vmatpush1.msra.mxu0 0.0
  %445 = vmatprep.subr.mxu0 0.0
  %446 = vmatpush1.msra.mxu0 0.0
  %447 = vmatprep.subr.mxu0 0.0
  %448 = vmatpush1.msra.mxu0 0.0
  %449 = vmatprep.subr.mxu0 0.0
  %450 = vmatpush1.msra.mxu0 0.0
  %451 = vmatprep.subr.mxu0 0.0
  %452 = vmatpush1.msra.mxu0 0.0
  %453 = vmatprep.subr.mxu0 %v421
  %454 = vmatpush1.msra.mxu0 %v418
  %455 = vmatprep.subr.mxu0 0.0
  %456 = vmatpush2.msra.mxu0 0.0
  %457 = vmatprep.subr.mxu0 0.0
  %458 = vmatpush2.msra.mxu0 0.0
  %459 = vmatprep.subr.mxu0 0.0
  %460 = vmatpush2.msra.mxu0 0.0
  %461 = vmatprep.subr.mxu0 0.0
  %462 = vmatpush2.msra.mxu0 0.0
  %463 = vmatprep.subr.mxu0 0.0
  %464 = vmatpush2.msra.mxu0 0.0
  %465 = vmatprep.subr.mxu0 0.0
  %466 = vmatpush2.msra.mxu0 0.0
  %467 = vmatprep.subr.mxu0 0.0
  %468 = vmatpush2.msra.mxu0 0.0
  %469 = vmatprep.subr.mxu0 0.0
  %470 = vmatpush2.msra.mxu0 0.0
  %471 = vmatprep.subr.mxu0 0.0
  %472 = vmatpush2.msra.mxu0 0.0
  %473 = vmatprep.subr.mxu0 0.0
  %474 = vmatpush2.msra.mxu0 0.0
  %475 = vmatprep.subr.mxu0 0.0
  %476 = vmatpush2.msra.mxu0 0.0
  %477 = vmatprep.subr.mxu0 0.0
  %478 = vmatpush2.msra.mxu0 0.0
  %479 = vmatprep.subr.mxu0 0.0
  %480 = vmatpush2.msra.mxu0 0.0
  %481 = vmatprep.subr.mxu0 0.0
  %482 = vmatpush2.msra.mxu0 0.0
  %483 = vmatprep.subr.mxu0 0.0
  %484 = vmatpush2.msra.mxu0 0.0
  %485 = vmatprep.subr.mxu0 0.0
  %486 = vmatpush2.msra.mxu0 0.0
  %487 = vmatprep.mubr.f32.mxu0 0.0
  %488 = vmatmul.mubr.f32.gmra.mxu0 %v415
  %v489 = vpop.f32.mrf.mxu0
  %v490 = vadd.f32 0.0, %v489
  %v491 = vpop.f32.mrf.mxu0
  %v492 = vadd.f32 0.0, %v491
  %493 = vdwg.mxu0
  %v494 = vadd.f32 %v402, %v490
  %v495 = vadd.f32 %v404, %v492
  %496 = vset.pattern.permute.xlu0 8
  %497 = vperm.xlu0 %496, %v22
  %v498 = vpop.permute.xlu0 %497
  %v500 = vadd.f32 %v494, %v498
  %v501 = vadd.f32 %v495, %v498
  %v502 = vmax.f32 %v500, 0.0
  %v503 = vmax.f32 %v501, 0.0
  %v504 = vmul.f32 %v502, %v155
  %v505 = vmul.f32 %v503, %v155
  %v506 = vsel %vm249, %v504, 0.0
  %v507 = vsel %vm249, %v505, 0.0
  %v508 = vadd.f32 %v506, %v507
  %509 = vadd.xlane.f32.xlu0 %v508
  %v510 = vpop.xlane.xlu0 %509
  %v511 = vmul.f32 %v510, 0.015625
  %v512 = vmul.f32 %v504, %v504
  %v513 = vmul.f32 %v505, %v505
  %v514 = vsel %vm249, %v512, 0.0
  %v515 = vsel %vm249, %v513, 0.0
  %v516 = vadd.f32 %v514, %v515
  %517 = vadd.xlane.f32.xlu0 %v516
  %v518 = vpop.xlane.xlu0 %517
  %v519 = vmul.f32 %v518, 0.015625
  %v520 = vmul.f32 %v511, %v511
  %v521 = vsub.f32 %v519, %v520
  %v522 = vmax.f32 %v521, 0.0
  %v523 = vadd.f32 %v522, 1e-05
  %v524 = vrsqrt.pop %v523
  %v525 = vmul.f32 %v22, %v524
  %527 = vset.pattern.permute.xlu0 9
  %528 = vperm.xlu0 %527, %v525
  %v529 = vpop.permute.xlu0 %528
  %v531 = vmul.f32 %v504, %v529
  %v532 = vmul.f32 %v505, %v529
  %v533 = vmul.f32 %v511, %v525
  %535 = vrot.lane.b32.xlu0 %v533, 1
  %v536 = vpop.permute.xlu0 %535
  %v538 = vsub.f32 %v22, %v536
  %540 = vset.pattern.permute.xlu0 10
  %541 = vperm.xlu0 %540, %v538
  %v542 = vpop.permute.xlu0 %541
  %v544 = vadd.f32 %v531, %v542
  %v545 = vadd.f32 %v532, %v542
  %v546 = vmul.f32 %v544, %v155
  %v547 = vmul.f32 %v545, %v155
  %548 = vst [vmem:[#allocation2] sm:$0xf] %v546
  %549 = vst [vmem:[#allocation2 + $0x8] sm:$0xf] %v547
  %v550 = vrot.slane %v232, 4
  %v551 = vrot.slane %v233, 4
  %v554 = vadd.f32 %v546, %v550
  %v555 = vadd.f32 %v547, %v551
  %556 = vrot.lane.b32.xlu0 %v554, 2
  %v557 = vpop.permute.xlu0 %556
  %558 = vrot.lane.b32.xlu0 %v555, 2
  %v559 = vpop.permute.xlu0 %558
  %v560 = vsel %vm240, %v557, %v559
  %v561 = vsel %vm240, %v559, %v557
  %563 = vrot.lane.b32.xlu0 %v16, 124
  %v564 = vpop.permute.xlu0 %563
  %v565 = vsel %vm246, %v564, 0
  %v568 = vsel %vm249, %v554, 0
  %v571 = vsel %vm249, %v555, 0
  %573 = vmatprep.subr.mxu0 0.0
  %574 = vmatpush1.msra.mxu0 0.0
  %575 = vmatprep.subr.mxu0 0.0
  %576 = vmatpush1.msra.mxu0 0.0
  %577 = vmatprep.subr.mxu0 0.0
  %578 = vmatpush1.msra.mxu0 0.0
  %579 = vmatprep.subr.mxu0 0.0
  %580 = vmatpush1.msra.mxu0 0.0
  %581 = vmatprep.subr.mxu0 0.0
  %582 = vmatpush1.msra.mxu0 0.0
  %583 = vmatprep.subr.mxu0 0.0
  %584 = vmatpush1.msra.mxu0 0.0
  %585 = vmatprep.subr.mxu0 0.0
  %586 = vmatpush1.msra.mxu0 0.0
  %587 = vmatprep.subr.mxu0 0.0
  %588 = vmatpush1.msra.mxu0 0.0
  %589 = vmatprep.subr.mxu0 0.0
  %590 = vmatpush1.msra.mxu0 0.0
  %591 = vmatprep.subr.mxu0 0.0
  %592 = vmatpush1.msra.mxu0 0.0
  %593 = vmatprep.subr.mxu0 0.0
  %594 = vmatpush1.msra.mxu0 0.0
  %595 = vmatprep.subr.mxu0 0.0
  %596 = vmatpush1.msra.mxu0 0.0
  %597 = vmatprep.subr.mxu0 0.0
  %598 = vmatpush1.msra.mxu0 0.0
  %599 = vmatprep.subr.mxu0 0.0
  %600 = vmatpush1.msra.mxu0 0.0
  %601 = vmatprep.subr.mxu0 0.0
  %602 = vmatpush1.msra.mxu0 0.0
  %603 = vmatprep.subr.mxu0 %v571
  %604 = vmatpush1.msra.mxu0 %v568
  %605 = vmatprep.subr.mxu0 0.0
  %606 = vmatpush2.msra.mxu0 0.0
  %607 = vmatprep.subr.mxu0 0.0
  %608 = vmatpush2.msra.mxu0 0.0
  %609 = vmatprep.subr.mxu0 0.0
  %610 = vmatpush2.msra.mxu0 0.0
  %611 = vmatprep.subr.mxu0 0.0
  %612 = vmatpush2.msra.mxu0 0.0
  %613 = vmatprep.subr.mxu0 0.0
  %614 = vmatpush2.msra.mxu0 0.0
  %615 = vmatprep.subr.mxu0 0.0
  %616 = vmatpush2.msra.mxu0 0.0
  %617 = vmatprep.subr.mxu0 0.0
  %618 = vmatpush2.msra.mxu0 0.0
  %619 = vmatprep.subr.mxu0 0.0
  %620 = vmatpush2.msra.mxu0 0.0
  %621 = vmatprep.subr.mxu0 0.0
  %622 = vmatpush2.msra.mxu0 0.0
  %623 = vmatprep.subr.mxu0 0.0
  %624 = vmatpush2.msra.mxu0 0.0
  %625 = vmatprep.subr.mxu0 0.0
  %626 = vmatpush2.msra.mxu0 0.0
  %627 = vmatprep.subr.mxu0 0.0
  %628 = vmatpush2.msra.mxu0 0.0
  %629 = vmatprep.subr.mxu0 0.0
  %630 = vmatpush2.msra.mxu0 0.0
  %631 = vmatprep.subr.mxu0 0.0
  %632 = vmatpush2.msra.mxu0 0.0
  %633 = vmatprep.subr.mxu0 0.0
  %634 = vmatpush2.msra.mxu0 0.0
  %635 = vmatprep.subr.mxu0 0.0
  %636 = vmatpush2.msra.mxu0 0.0
  %637 = vmatprep.mubr.f32.mxu0 0.0
  %638 = vmatmul.mubr.f32.gmra.mxu0 %v565
  %v639 = vpop.f32.mrf.mxu0
  %v640 = vadd.f32 0.0, %v639
  %v641 = vpop.f32.mrf.mxu0
  %v642 = vadd.f32 0.0, %v641
  %643 = vdwg.mxu0
  %v644 = vsel %vm246, %v16, 0
  %v647 = vsel %vm249, %v561, 0
  %v650 = vsel %vm249, %v560, 0
  %652 = vmatprep.subr.mxu0 0.0
  %653 = vmatpush1.msra.mxu0 0.0
  %654 = vmatprep.subr.mxu0 0.0
  %655 = vmatpush1.msra.mxu0 0.0
  %656 = vmatprep.subr.mxu0 0.0
  %657 = vmatpush1.msra.mxu0 0.0
  %658 = vmatprep.subr.mxu0 0.0
  %659 = vmatpush1.msra.mxu0 0.0
  %660 = vmatprep.subr.mxu0 0.0
  %661 = vmatpush1.msra.mxu0 0.0
  %662 = vmatprep.subr.mxu0 0.0
  %663 = vmatpush1.msra.mxu0 0.0
  %664 = vmatprep.subr.mxu0 0.0
  %665 = vmatpush1.msra.mxu0 0.0
  %666 = vmatprep.subr.mxu0 0.0
  %667 = vmatpush1.msra.mxu0 0.0
  %668 = vmatprep.subr.mxu0 0.0
  %669 = vmatpush1.msra.mxu0 0.0
  %670 = vmatprep.subr.mxu0 0.0
  %671 = vmatpush1.msra.mxu0 0.0
  %672 = vmatprep.subr.mxu0 0.0
  %673 = vmatpush1.msra.mxu0 0.0
  %674 = vmatprep.subr.mxu0 0.0
  %675 = vmatpush1.msra.mxu0 0.0
  %676 = vmatprep.subr.mxu0 0.0
  %677 = vmatpush1.msra.mxu0 0.0
  %678 = vmatprep.subr.mxu0 0.0
  %679 = vmatpush1.msra.mxu0 0.0
  %680 = vmatprep.subr.mxu0 0.0
  %681 = vmatpush1.msra.mxu0 0.0
  %682 = vmatprep.subr.mxu0 %v650
  %683 = vmatpush1.msra.mxu0 %v647
  %684 = vmatprep.subr.mxu0 0.0
  %685 = vmatpush2.msra.mxu0 0.0
  %686 = vmatprep.subr.mxu0 0.0
  %687 = vmatpush2.msra.mxu0 0.0
  %688 = vmatprep.subr.mxu0 0.0
  %689 = vmatpush2.msra.mxu0 0.0
  %690 = vmatprep.subr.mxu0 0.0
  %691 = vmatpush2.msra.mxu0 0.0
  %692 = vmatprep.subr.mxu0 0.0
  %693 = vmatpush2.msra.mxu0 0.0
  %694 = vmatprep.subr.mxu0 0.0
  %695 = vmatpush2.msra.mxu0 0.0
  %696 = vmatprep.subr.mxu0 0.0
  %697 = vmatpush2.msra.mxu0 0.0
  %698 = vmatprep.subr.mxu0 0.0
  %699 = vmatpush2.msra.mxu0 0.0
  %700 = vmatprep.subr.mxu0 0.0
  %701 = vmatpush2.msra.mxu0 0.0
  %702 = vmatprep.subr.mxu0 0.0
  %703 = vmatpush2.msra.mxu0 0.0
  %704 = vmatprep.subr.mxu0 0.0
  %705 = vmatpush2.msra.mxu0 0.0
  %706 = vmatprep.subr.mxu0 0.0
  %707 = vmatpush2.msra.mxu0 0.0
  %708 = vmatprep.subr.mxu0 0.0
  %709 = vmatpush2.msra.mxu0 0.0
  %710 = vmatprep.subr.mxu0 0.0
  %711 = vmatpush2.msra.mxu0 0.0
  %712 = vmatprep.subr.mxu0 0.0
  %713 = vmatpush2.msra.mxu0 0.0
  %714 = vmatprep.subr.mxu0 0.0
  %715 = vmatpush2.msra.mxu0 0.0
  %716 = vmatprep.mubr.f32.mxu0 0.0
  %717 = vmatmul.mubr.f32.gmra.mxu0 %v644
  %v718 = vpop.f32.mrf.mxu0
  %v719 = vadd.f32 %v640, %v718
  %v720 = vpop.f32.mrf.mxu0
  %v721 = vadd.f32 %v642, %v720
  %722 = vdwg.mxu0
  %723 = vrot.lane.b32.xlu0 %v554, 126
  %v724 = vpop.permute.xlu0 %723
  %725 = vrot.lane.b32.xlu0 %v555, 126
  %v726 = vpop.permute.xlu0 %725
  %v727 = vsel %vm410, %v724, %v726
  %v728 = vsel %vm410, %v726, %v724
  %729 = vrot.lane.b32.xlu0 %v16, 120
  %v730 = vpop.permute.xlu0 %729
  %v731 = vsel %vm246, %v730, 0
  %v734 = vsel %vm249, %v727, 0
  %v737 = vsel %vm249, %v728, 0
  %739 = vmatprep.subr.mxu0 0.0
  %740 = vmatpush1.msra.mxu0 0.0
  %741 = vmatprep.subr.mxu0 0.0
  %742 = vmatpush1.msra.mxu0 0.0
  %743 = vmatprep.subr.mxu0 0.0
  %744 = vmatpush1.msra.mxu0 0.0
  %745 = vmatprep.subr.mxu0 0.0
  %746 = vmatpush1.msra.mxu0 0.0
  %747 = vmatprep.subr.mxu0 0.0
  %748 = vmatpush1.msra.mxu0 0.0
  %749 = vmatprep.subr.mxu0 0.0
  %750 = vmatpush1.msra.mxu0 0.0
  %751 = vmatprep.subr.mxu0 0.0
  %752 = vmatpush1.msra.mxu0 0.0
  %753 = vmatprep.subr.mxu0 0.0
  %754 = vmatpush1.msra.mxu0 0.0
  %755 = vmatprep.subr.mxu0 0.0
  %756 = vmatpush1.msra.mxu0 0.0
  %757 = vmatprep.subr.mxu0 0.0
  %758 = vmatpush1.msra.mxu0 0.0
  %759 = vmatprep.subr.mxu0 0.0
  %760 = vmatpush1.msra.mxu0 0.0
  %761 = vmatprep.subr.mxu0 0.0
  %762 = vmatpush1.msra.mxu0 0.0
  %763 = vmatprep.subr.mxu0 0.0
  %764 = vmatpush1.msra.mxu0 0.0
  %765 = vmatprep.subr.mxu0 0.0
  %766 = vmatpush1.msra.mxu0 0.0
  %767 = vmatprep.subr.mxu0 0.0
  %768 = vmatpush1.msra.mxu0 0.0
  %769 = vmatprep.subr.mxu0 %v737
  %770 = vmatpush1.msra.mxu0 %v734
  %771 = vmatprep.subr.mxu0 0.0
  %772 = vmatpush2.msra.mxu0 0.0
  %773 = vmatprep.subr.mxu0 0.0
  %774 = vmatpush2.msra.mxu0 0.0
  %775 = vmatprep.subr.mxu0 0.0
  %776 = vmatpush2.msra.mxu0 0.0
  %777 = vmatprep.subr.mxu0 0.0
  %778 = vmatpush2.msra.mxu0 0.0
  %779 = vmatprep.subr.mxu0 0.0
  %780 = vmatpush2.msra.mxu0 0.0
  %781 = vmatprep.subr.mxu0 0.0
  %782 = vmatpush2.msra.mxu0 0.0
  %783 = vmatprep.subr.mxu0 0.0
  %784 = vmatpush2.msra.mxu0 0.0
  %785 = vmatprep.subr.mxu0 0.0
  %786 = vmatpush2.msra.mxu0 0.0
  %787 = vmatprep.subr.mxu0 0.0
  %788 = vmatpush2.msra.mxu0 0.0
  %789 = vmatprep.subr.mxu0 0.0
  %790 = vmatpush2.msra.mxu0 0.0
  %791 = vmatprep.subr.mxu0 0.0
  %792 = vmatpush2.msra.mxu0 0.0
  %793 = vmatprep.subr.mxu0 0.0
  %794 = vmatpush2.msra.mxu0 0.0
  %795 = vmatprep.subr.mxu0 0.0
  %796 = vmatpush2.msra.mxu0 0.0
  %797 = vmatprep.subr.mxu0 0.0
  %798 = vmatpush2.msra.mxu0 0.0
  %799 = vmatprep.subr.mxu0 0.0
  %800 = vmatpush2.msra.mxu0 0.0
  %801 = vmatprep.subr.mxu0 0.0
  %802 = vmatpush2.msra.mxu0 0.0
  %803 = vmatprep.mubr.f32.mxu0 0.0
  %804 = vmatmul.mubr.f32.gmra.mxu0 %v731
  %v805 = vpop.f32.mrf.mxu0
  %v806 = vadd.f32 0.0, %v805
  %v807 = vpop.f32.mrf.mxu0
  %v808 = vadd.f32 0.0, %v807
  %809 = vdwg.mxu0
  %v810 = vadd.f32 %v719, %v806
  %v811 = vadd.f32 %v721, %v808
  %v812 = vrot.slane %v498, 4
  %v814 = vadd.f32 %v810, %v812
  %v815 = vadd.f32 %v811, %v812
  %v816 = vmax.f32 %v814, 0.0
  %v817 = vmax.f32 %v815, 0.0
  %v818 = vmul.f32 %v816, %v155
  %v819 = vmul.f32 %v817, %v155
  %v820 = vsel %vm249, %v818, 0.0
  %v821 = vsel %vm249, %v819, 0.0
  %v822 = vadd.f32 %v820, %v821
  %823 = vadd.xlane.f32.xlu0 %v822
  %v824 = vpop.xlane.xlu0 %823
  %v825 = vmul.f32 %v824, 0.015625
  %v826 = vmul.f32 %v818, %v818
  %v827 = vmul.f32 %v819, %v819
  %v828 = vsel %vm249, %v826, 0.0
  %v829 = vsel %vm249, %v827, 0.0
  %v830 = vadd.f32 %v828, %v829
  %831 = vadd.xlane.f32.xlu0 %v830
  %v832 = vpop.xlane.xlu0 %831
  %v833 = vmul.f32 %v832, 0.015625
  %v834 = vmul.f32 %v825, %v825
  %v835 = vsub.f32 %v833, %v834
  %v836 = vmax.f32 %v835, 0.0
  %v837 = vadd.f32 %v836, 1e-05
  %v838 = vrsqrt.pop %v837
  %v840 = vrot.slane %v838, 4
  %v842 = vmul.f32 %v22, %v840
  %844 = vset.pattern.permute.xlu0 9
  %845 = vperm.xlu0 %844, %v842
  %v846 = vpop.permute.xlu0 %845
  %v847 = vrot.slane %v846, 4
  %v849 = vmul.f32 %v818, %v847
  %v850 = vmul.f32 %v819, %v847
  %v851 = vrot.slane %v842, 4
  %852 = vrot.lane.b32.xlu0 %v851, 119
  %v853 = vpop.permute.xlu0 %852
  %v855 = vmul.f32 %v825, %v853
  %v857 = vrot.slane %v855, 4
  %858 = vrot.lane.b32.xlu0 %v857, 10
  %v859 = vpop.permute.xlu0 %858
  %v861 = vsub.f32 %v22, %v859
  %863 = vset.pattern.permute.xlu0 10
  %864 = vperm.xlu0 %863, %v861
  %v865 = vpop.permute.xlu0 %864
  %v866 = vrot.slane %v865, 4
  %v868 = vadd.f32 %v849, %v866
  %v869 = vadd.f32 %v850, %v866
  %v870 = vmul.f32 %v868, %v155
  %v871 = vmul.f32 %v869, %v155
  %v874 = vrot.slane %v870, 4
  %v875 = vrot.slane %v871, 4
  %878 = vst [vmem:[#allocation2] sm:$0xf0] %v874
  %879 = vst [vmem:[#allocation2 + $0x8] sm:$0xf0] %v875
  %v880 = vadd.f32 %v870, %v234
  %v881 = vadd.f32 %v871, %v235
  %882 = vrot.lane.b32.xlu0 %v880, 2
  %v883 = vpop.permute.xlu0 %882
  %884 = vrot.lane.b32.xlu0 %v881, 2
  %v885 = vpop.permute.xlu0 %884
  %v886 = vsel %vm240, %v883, %v885
  %v887 = vsel %vm240, %v885, %v883
  %889 = vrot.lane.b32.xlu0 %v17, 124
  %v890 = vpop.permute.xlu0 %889
  %v891 = vsel %vm246, %v890, 0
  %v894 = vsel %vm249, %v880, 0
  %v897 = vsel %vm249, %v881, 0
  %899 = vmatprep.subr.mxu0 0.0
  %900 = vmatpush1.msra.mxu0 0.0
  %901 = vmatprep.subr.mxu0 0.0
  %902 = vmatpush1.msra.mxu0 0.0
  %903 = vmatprep.subr.mxu0 0.0
  %904 = vmatpush1.msra.mxu0 0.0
  %905 = vmatprep.subr.mxu0 0.0
  %906 = vmatpush1.msra.mxu0 0.0
  %907 = vmatprep.subr.mxu0 0.0
  %908 = vmatpush1.msra.mxu0 0.0
  %909 = vmatprep.subr.mxu0 0.0
  %910 = vmatpush1.msra.mxu0 0.0
  %911 = vmatprep.subr.mxu0 0.0
  %912 = vmatpush1.msra.mxu0 0.0
  %913 = vmatprep.subr.mxu0 0.0
  %914 = vmatpush1.msra.mxu0 0.0
  %915 = vmatprep.subr.mxu0 0.0
  %916 = vmatpush1.msra.mxu0 0.0
  %917 = vmatprep.subr.mxu0 0.0
  %918 = vmatpush1.msra.mxu0 0.0
  %919 = vmatprep.subr.mxu0 0.0
  %920 = vmatpush1.msra.mxu0 0.0
  %921 = vmatprep.subr.mxu0 0.0
  %922 = vmatpush1.msra.mxu0 0.0
  %923 = vmatprep.subr.mxu0 0.0
  %924 = vmatpush1.msra.mxu0 0.0
  %925 = vmatprep.subr.mxu0 0.0
  %926 = vmatpush1.msra.mxu0 0.0
  %927 = vmatprep.subr.mxu0 0.0
  %928 = vmatpush1.msra.mxu0 0.0
  %929 = vmatprep.subr.mxu0 %v897
  %930 = vmatpush1.msra.mxu0 %v894
  %931 = vmatprep.subr.mxu0 0.0
  %932 = vmatpush2.msra.mxu0 0.0
  %933 = vmatprep.subr.mxu0 0.0
  %934 = vmatpush2.msra.mxu0 0.0
  %935 = vmatprep.subr.mxu0 0.0
  %936 = vmatpush2.msra.mxu0 0.0
  %937 = vmatprep.subr.mxu0 0.0
  %938 = vmatpush2.msra.mxu0 0.0
  %939 = vmatprep.subr.mxu0 0.0
  %940 = vmatpush2.msra.mxu0 0.0
  %941 = vmatprep.subr.mxu0 0.0
  %942 = vmatpush2.msra.mxu0 0.0
  %943 = vmatprep.subr.mxu0 0.0
  %944 = vmatpush2.msra.mxu0 0.0
  %945 = vmatprep.subr.mxu0 0.0
  %946 = vmatpush2.msra.mxu0 0.0
  %947 = vmatprep.subr.mxu0 0.0
  %948 = vmatpush2.msra.mxu0 0.0
  %949 = vmatprep.subr.mxu0 0.0
  %950 = vmatpush2.msra.mxu0 0.0
  %951 = vmatprep.subr.mxu0 0.0
  %952 = vmatpush2.msra.mxu0 0.0
  %953 = vmatprep.subr.mxu0 0.0
  %954 = vmatpush2.msra.mxu0 0.0
  %955 = vmatprep.subr.mxu0 0.0
  %956 = vmatpush2.msra.mxu0 0.0
  %957 = vmatprep.subr.mxu0 0.0
  %958 = vmatpush2.msra.mxu0 0.0
  %959 = vmatprep.subr.mxu0 0.0
  %960 = vmatpush2.msra.mxu0 0.0
  %961 = vmatprep.subr.mxu0 0.0
  %962 = vmatpush2.msra.mxu0 0.0
  %963 = vmatprep.mubr.f32.mxu0 0.0
  %964 = vmatmul.mubr.f32.gmra.mxu0 %v891
  %v965 = vpop.f32.mrf.mxu0
  %v966 = vadd.f32 0.0, %v965
  %v967 = vpop.f32.mrf.mxu0
  %v968 = vadd.f32 0.0, %v967
  %969 = vdwg.mxu0
  %v970 = vsel %vm246, %v17, 0
  %v973 = vsel %vm249, %v887, 0
  %v976 = vsel %vm249, %v886, 0
  %978 = vmatprep.subr.mxu0 0.0
  %979 = vmatpush1.msra.mxu0 0.0
  %980 = vmatprep.subr.mxu0 0.0
  %981 = vmatpush1.msra.mxu0 0.0
  %982 = vmatprep.subr.mxu0 0.0
  %983 = vmatpush1.msra.mxu0 0.0
  %984 = vmatprep.subr.mxu0 0.0
  %985 = vmatpush1.msra.mxu0 0.0
  %986 = vmatprep.subr.mxu0 0.0
  %987 = vmatpush1.msra.mxu0 0.0
  %988 = vmatprep.subr.mxu0 0.0
  %989 = vmatpush1.msra.mxu0 0.0
  %990 = vmatprep.subr.mxu0 0.0
  %991 = vmatpush1.msra.mxu0 0.0
  %992 = vmatprep.subr.mxu0 0.0
  %993 = vmatpush1.msra.mxu0 0.0
  %994 = vmatprep.subr.mxu0 0.0
  %995 = vmatpush1.msra.mxu0 0.0
  %996 = vmatprep.subr.mxu0 0.0
  %997 = vmatpush1.msra.mxu0 0.0
  %998 = vmatprep.subr.mxu0 0.0
  %999 = vmatpush1.msra.mxu0 0.0
  %1000 = vmatprep.subr.mxu0 0.0
  %1001 = vmatpush1.msra.mxu0 0.0
  %1002 = vmatprep.subr.mxu0 0.0
  %1003 = vmatpush1.msra.mxu0 0.0
  %1004 = vmatprep.subr.mxu0 0.0
  %1005 = vmatpush1.msra.mxu0 0.0
  %1006 = vmatprep.subr.mxu0 0.0
  %1007 = vmatpush1.msra.mxu0 0.0
  %1008 = vmatprep.subr.mxu0 %v976
  %1009 = vmatpush1.msra.mxu0 %v973
  %1010 = vmatprep.subr.mxu0 0.0
  %1011 = vmatpush2.msra.mxu0 0.0
  %1012 = vmatprep.subr.mxu0 0.0
  %1013 = vmatpush2.msra.mxu0 0.0
  %1014 = vmatprep.subr.mxu0 0.0
  %1015 = vmatpush2.msra.mxu0 0.0
  %1016 = vmatprep.subr.mxu0 0.0
  %1017 = vmatpush2.msra.mxu0 0.0
  %1018 = vmatprep.subr.mxu0 0.0
  %1019 = vmatpush2.msra.mxu0 0.0
  %1020 = vmatprep.subr.mxu0 0.0
  %1021 = vmatpush2.msra.mxu0 0.0
  %1022 = vmatprep.subr.mxu0 0.0
  %1023 = vmatpush2.msra.mxu0 0.0
  %1024 = vmatprep.subr.mxu0 0.0
  %1025 = vmatpush2.msra.mxu0 0.0
  %1026 = vmatprep.subr.mxu0 0.0
  %1027 = vmatpush2.msra.mxu0 0.0
  %1028 = vmatprep.subr.mxu0 0.0
  %1029 = vmatpush2.msra.mxu0 0.0
  %1030 = vmatprep.subr.mxu0 0.0
  %1031 = vmatpush2.msra.mxu0 0.0
  %1032 = vmatprep.subr.mxu0 0.0
  %1033 = vmatpush2.msra.mxu0 0.0
  %1034 = vmatprep.subr.mxu0 0.0
  %1035 = vmatpush2.msra.mxu0 0.0
  %1036 = vmatprep.subr.mxu0 0.0
  %1037 = vmatpush2.msra.mxu0 0.0
  %1038 = vmatprep.subr.mxu0 0.0
  %1039 = vmatpush2.msra.mxu0 0.0
  %1040 = vmatprep.subr.mxu0 0.0
  %1041 = vmatpush2.msra.mxu0 0.0
  %1042 = vmatprep.mubr.f32.mxu0 0.0
  %1043 = vmatmul.mubr.f32.gmra.mxu0 %v970
  %v1044 = vpop.f32.mrf.mxu0
  %v1045 = vadd.f32 %v966, %v1044
  %v1046 = vpop.f32.mrf.mxu0
  %v1047 = vadd.f32 %v968, %v1046
  %1048 = vdwg.mxu0
  %1049 = vrot.lane.b32.xlu0 %v880, 126
  %v1050 = vpop.permute.xlu0 %1049
  %1051 = vrot.lane.b32.xlu0 %v881, 126
  %v1052 = vpop.permute.xlu0 %1051
  %v1053 = vsel %vm410, %v1050, %v1052
  %v1054 = vsel %vm410, %v1052, %v1050
  %1055 = vrot.lane.b32.xlu0 %v17, 120
  %v1056 = vpop.permute.xlu0 %1055
  %v1057 = vsel %vm246, %v1056, 0
  %v1060 = vsel %vm249, %v1053, 0
  %v1063 = vsel %vm249, %v1054, 0
  %1065 = vmatprep.subr.mxu0 0.0
  %1066 = vmatpush1.msra.mxu0 0.0
  %1067 = vmatprep.subr.mxu0 0.0
  %1068 = vmatpush1.msra.mxu0 0.0
  %1069 = vmatprep.subr.mxu0 0.0
  %1070 = vmatpush1.msra.mxu0 0.0
  %1071 = vmatprep.subr.mxu0 0.0
  %1072 = vmatpush1.msra.mxu0 0.0
  %1073 = vmatprep.subr.mxu0 0.0
  %1074 = vmatpush1.msra.mxu0 0.0
  %1075 = vmatprep.subr.mxu0 0.0
  %1076 = vmatpush1.msra.mxu0 0.0
  %1077 = vmatprep.subr.mxu0 0.0
  %1078 = vmatpush1.msra.mxu0 0.0
  %1079 = vmatprep.subr.mxu0 0.0
  %1080 = vmatpush1.msra.mxu0 0.0
  %1081 = vmatprep.subr.mxu0 0.0
  %1082 = vmatpush1.msra.mxu0 0.0
  %1083 = vmatprep.subr.mxu0 0.0
  %1084 = vmatpush1.msra.mxu0 0.0
  %1085 = vmatprep.subr.mxu0 0.0
  %1086 = vmatpush1.msra.mxu0 0.0
  %1087 = vmatprep.subr.mxu0 0.0
  %1088 = vmatpush1.msra.mxu0 0.0
  %1089 = vmatprep.subr.mxu0 0.0
  %1090 = vmatpush1.msra.mxu0 0.0
  %1091 = vmatprep.subr.mxu0 0.0
  %1092 = vmatpush1.msra.mxu0 0.0
  %1093 = vmatprep.subr.mxu0 0.0
  %1094 = vmatpush1.msra.mxu0 0.0
  %1095 = vmatprep.subr.mxu0 %v1063
  %1096 = vmatpush1.msra.mxu0 %v1060
  %1097 = vmatprep.subr.mxu0 0.0
  %1098 = vmatpush2.msra.mxu0 0.0
  %1099 = vmatprep.subr.mxu0 0.0
  %1100 = vmatpush2.msra.mxu0 0.0
  %1101 = vmatprep.subr.mxu0 0.0
  %1102 = vmatpush2.msra.mxu0 0.0
  %1103 = vmatprep.subr.mxu0 0.0
  %1104 = vmatpush2.msra.mxu0 0.0
  %1105 = vmatprep.subr.mxu0 0.0
  %1106 = vmatpush2.msra.mxu0 0.0
  %1107 = vmatprep.subr.mxu0 0.0
  %1108 = vmatpush2.msra.mxu0 0.0
  %1109 = vmatprep.subr.mxu0 0.0
  %1110 = vmatpush2.msra.mxu0 0.0
  %1111 = vmatprep.subr.mxu0 0.0
  %1112 = vmatpush2.msra.mxu0 0.0
  %1113 = vmatprep.subr.mxu0 0.0
  %1114 = vmatpush2.msra.mxu0 0.0
  %1115 = vmatprep.subr.mxu0 0.0
  %1116 = vmatpush2.msra.mxu0 0.0
  %1117 = vmatprep.subr.mxu0 0.0
  %1118 = vmatpush2.msra.mxu0 0.0
  %1119 = vmatprep.subr.mxu0 0.0
  %1120 = vmatpush2.msra.mxu0 0.0
  %1121 = vmatprep.subr.mxu0 0.0
  %1122 = vmatpush2.msra.mxu0 0.0
  %1123 = vmatprep.subr.mxu0 0.0
  %1124 = vmatpush2.msra.mxu0 0.0
  %1125 = vmatprep.subr.mxu0 0.0
  %1126 = vmatpush2.msra.mxu0 0.0
  %1127 = vmatprep.subr.mxu0 0.0
  %1128 = vmatpush2.msra.mxu0 0.0
  %1129 = vmatprep.mubr.f32.mxu0 0.0
  %1130 = vmatmul.mubr.f32.gmra.mxu0 %v1057
  %v1131 = vpop.f32.mrf.mxu0
  %v1132 = vadd.f32 0.0, %v1131
  %v1133 = vpop.f32.mrf.mxu0
  %v1134 = vadd.f32 0.0, %v1133
  %1135 = vdwg.mxu0
  %v1136 = vadd.f32 %v1045, %v1132
  %v1137 = vadd.f32 %v1047, %v1134
  %1138 = vset.pattern.permute.xlu0 8
  %1139 = vperm.xlu0 %1138, %v23
  %v1140 = vpop.permute.xlu0 %1139
  %v1142 = vadd.f32 %v1136, %v1140
  %v1143 = vadd.f32 %v1137, %v1140
  %v1144 = vmax.f32 %v1142, 0.0
  %v1145 = vmax.f32 %v1143, 0.0
  %v1146 = vmul.f32 %v1144, %v155
  %v1147 = vmul.f32 %v1145, %v155
  %v1148 = vsel %vm249, %v1146, 0.0
  %v1149 = vsel %vm249, %v1147, 0.0
  %v1150 = vadd.f32 %v1148, %v1149
  %1151 = vadd.xlane.f32.xlu0 %v1150
  %v1152 = vpop.xlane.xlu0 %1151
  %v1153 = vmul.f32 %v1152, 0.015625
  %v1154 = vmul.f32 %v1146, %v1146
  %v1155 = vmul.f32 %v1147, %v1147
  %v1156 = vsel %vm249, %v1154, 0.0
  %v1157 = vsel %vm249, %v1155, 0.0
  %v1158 = vadd.f32 %v1156, %v1157
  %1159 = vadd.xlane.f32.xlu0 %v1158
  %v1160 = vpop.xlane.xlu0 %1159
  %v1161 = vmul.f32 %v1160, 0.015625
  %v1162 = vmul.f32 %v1153, %v1153
  %v1163 = vsub.f32 %v1161, %v1162
  %v1164 = vmax.f32 %v1163, 0.0
  %v1165 = vadd.f32 %v1164, 1e-05
  %v1166 = vrsqrt.pop %v1165
  %v1167 = vmul.f32 %v23, %v1166
  %1169 = vset.pattern.permute.xlu0 9
  %1170 = vperm.xlu0 %1169, %v1167
  %v1171 = vpop.permute.xlu0 %1170
  %v1173 = vmul.f32 %v1146, %v1171
  %v1174 = vmul.f32 %v1147, %v1171
  %v1175 = vmul.f32 %v1153, %v1167
  %1177 = vrot.lane.b32.xlu0 %v1175, 1
  %v1178 = vpop.permute.xlu0 %1177
  %v1180 = vsub.f32 %v23, %v1178
  %1182 = vset.pattern.permute.xlu0 10
  %1183 = vperm.xlu0 %1182, %v1180
  %v1184 = vpop.permute.xlu0 %1183
  %v1186 = vadd.f32 %v1173, %v1184
  %v1187 = vadd.f32 %v1174, %v1184
  %v1188 = vmul.f32 %v1186, %v155
  %v1189 = vmul.f32 %v1187, %v155
  %1190 = vst [vmem:[#allocation2 + $0x10] sm:$0xf] %v1188
  %1191 = vst [vmem:[#allocation2 + $0x18] sm:$0xf] %v1189
  %1192 = vst [vmem:[#allocation2 + $0x10] sm:$0xf0] %v234
  %1193 = vst [vmem:[#allocation2 + $0x18] sm:$0xf0] %v235
  %v1194 = vld [vmem:[#allocation2] sm:$0xff]
  %v1195 = vld [vmem:[#allocation2 + $0x8] sm:$0xff]
  %v1196 = vld [vmem:[#allocation2 + $0x10] sm:$0xff]
  %v1197 = vld [vmem:[#allocation2 + $0x18] sm:$0xff]
  %1198 = vset.pattern.permute.xlu0 3
  %1199 = vperm.xlu0 %1198, %v22
  %v1200 = vpop.permute.xlu0 %1199
  %1202 = vset.pattern.permute.xlu0 3
  %1203 = vperm.xlu0 %1202, %v23
  %v1204 = vpop.permute.xlu0 %1203
  %vm1206 = vcmask 130048
  %v1208 = vsel %vm1206, %v18, 0
  %v1211 = vsel %vm1206, %v19, 0
  %1213 = vmatprep.subr.mxu0 0.0
  %1214 = vmatpush1.msra.mxu0 0.0
  %1215 = vmatprep.subr.mxu0 0.0
  %1216 = vmatpush1.msra.mxu0 0.0
  %1217 = vmatprep.subr.mxu0 0.0
  %1218 = vmatpush1.msra.mxu0 0.0
  %1219 = vmatprep.subr.mxu0 0.0
  %1220 = vmatpush1.msra.mxu0 0.0
  %1221 = vmatprep.subr.mxu0 0.0
  %1222 = vmatpush1.msra.mxu0 0.0
  %1223 = vmatprep.subr.mxu0 0.0
  %1224 = vmatpush1.msra.mxu0 0.0
  %1225 = vmatprep.subr.mxu0 0.0
  %1226 = vmatpush1.msra.mxu0 0.0
  %1227 = vmatprep.subr.mxu0 0.0
  %1228 = vmatpush1.msra.mxu0 0.0
  %1229 = vmatprep.subr.mxu0 0.0
  %1230 = vmatpush1.msra.mxu0 0.0
  %1231 = vmatprep.subr.mxu0 0.0
  %1232 = vmatpush1.msra.mxu0 0.0
  %1233 = vmatprep.subr.mxu0 0.0
  %1234 = vmatpush1.msra.mxu0 0.0
  %1235 = vmatprep.subr.mxu0 0.0
  %1236 = vmatpush1.msra.mxu0 0.0
  %1237 = vmatprep.subr.mxu0 0.0
  %1238 = vmatpush1.msra.mxu0 0.0
  %1239 = vmatprep.subr.mxu0 0.0
  %1240 = vmatpush1.msra.mxu0 0.0
  %1241 = vmatprep.subr.mxu0 %v1197
  %1242 = vmatpush1.msra.mxu0 %v1196
  %1243 = vmatprep.subr.mxu0 %v1195
  %1244 = vmatpush1.msra.mxu0 %v1194
  %1245 = vmatprep.subr.mxu0 0.0
  %1246 = vmatpush2.msra.mxu0 0.0
  %1247 = vmatprep.subr.mxu0 0.0
  %1248 = vmatpush2.msra.mxu0 0.0
  %1249 = vmatprep.subr.mxu0 0.0
  %1250 = vmatpush2.msra.mxu0 0.0
  %1251 = vmatprep.subr.mxu0 0.0
  %1252 = vmatpush2.msra.mxu0 0.0
  %1253 = vmatprep.subr.mxu0 0.0
  %1254 = vmatpush2.msra.mxu0 0.0
  %1255 = vmatprep.subr.mxu0 0.0
  %1256 = vmatpush2.msra.mxu0 0.0
  %1257 = vmatprep.subr.mxu0 0.0
  %1258 = vmatpush2.msra.mxu0 0.0
  %1259 = vmatprep.subr.mxu0 0.0
  %1260 = vmatpush2.msra.mxu0 0.0
  %1261 = vmatprep.subr.mxu0 0.0
  %1262 = vmatpush2.msra.mxu0 0.0
  %1263 = vmatprep.subr.mxu0 0.0
  %1264 = vmatpush2.msra.mxu0 0.0
  %1265 = vmatprep.subr.mxu0 0.0
  %1266 = vmatpush2.msra.mxu0 0.0
  %1267 = vmatprep.subr.mxu0 0.0
  %1268 = vmatpush2.msra.mxu0 0.0
  %1269 = vmatprep.subr.mxu0 0.0
  %1270 = vmatpush2.msra.mxu0 0.0
  %1271 = vmatprep.subr.mxu0 0.0
  %1272 = vmatpush2.msra.mxu0 0.0
  %1273 = vmatprep.subr.mxu0 0.0
  %1274 = vmatpush2.msra.mxu0 0.0
  %1275 = vmatprep.subr.mxu0 0.0
  %1276 = vmatpush2.msra.mxu0 0.0
  %1277 = vmatprep.mubr.f32.mxu0 0.0
  %1278 = vmatmul.mubr.f32.gmra.mxu0 %v1208
  %v1279 = vpop.f32.mrf.mxu0
  %v1280 = vadd.f32 %v1200, %v1279
  %v1281 = vpop.f32.mrf.mxu0
  %v1282 = vadd.f32 %v1200, %v1281
  %1283 = vmatprep.mubr.f32.mxu0 0.0
  %1284 = vmatmul.mubr.f32.gmra.mxu0 %v1211
  %v1285 = vpop.f32.mrf.mxu0
  %v1286 = vadd.f32 %v1204, %v1285
  %v1287 = vpop.f32.mrf.mxu0
  %v1288 = vadd.f32 %v1204, %v1287
  %1289 = vdwg.mxu0
  %v1290 = vmax.f32 %v1280, 0.0
  %v1291 = vmax.f32 %v1282, 0.0
  %v1292 = vmax.f32 %v1286, 0.0
  %v1293 = vmax.f32 %v1288, 0.0
  %v1294 = vmul.f32 %v1290, %v155
  %v1295 = vmul.f32 %v1291, %v155
  %v1296 = vmul.f32 %v1292, %v155
  %v1297 = vmul.f32 %v1293, %v155
  %v1298 = vadd.f32 %v1294, %v1295
  %1299 = vadd.xlane.f32.xlu0 %v1298
  %v1300 = vpop.xlane.xlu0 %1299
  %v1301 = vadd.f32 %v1296, %v1297
  %1302 = vadd.xlane.f32.xlu0 %v1301
  %v1303 = vpop.xlane.xlu0 %1302
  %v1304 = vmul.f32 %v1300, 0.015625
  %v1305 = vmul.f32 %v1303, 0.015625
  %v1306 = vmul.f32 %v1294, %v1294
  %v1307 = vmul.f32 %v1295, %v1295
  %v1308 = vmul.f32 %v1296, %v1296
  %v1309 = vmul.f32 %v1297, %v1297
  %v1310 = vadd.f32 %v1306, %v1307
  %1311 = vadd.xlane.f32.xlu0 %v1310
  %v1312 = vpop.xlane.xlu0 %1311
  %v1313 = vadd.f32 %v1308, %v1309
  %1314 = vadd.xlane.f32.xlu0 %v1313
  %v1315 = vpop.xlane.xlu0 %1314
  %v1316 = vmul.f32 %v1312, 0.015625
  %v1317 = vmul.f32 %v1315, 0.015625
  %v1318 = vmul.f32 %v1304, %v1304
  %v1319 = vmul.f32 %v1305, %v1305
  %v1320 = vsub.f32 %v1316, %v1318
  %v1321 = vsub.f32 %v1317, %v1319
  %v1322 = vmax.f32 %v1320, 0.0
  %v1323 = vmax.f32 %v1321, 0.0
  %v1324 = vadd.f32 %v1322, 1e-05
  %v1325 = vadd.f32 %v1323, 1e-05
  %v1326 = vrsqrt.pop %v1324
  %v1327 = vrsqrt.pop %v1325
  %v1328 = vmul.f32 %v22, %v1326
  %v1329 = vmul.f32 %v23, %v1327
  %1331 = vset.pattern.permute.xlu0 4
  %1332 = vperm.xlu0 %1331, %v1328
  %v1333 = vpop.permute.xlu0 %1332
  %1336 = vset.pattern.permute.xlu0 4
  %1337 = vperm.xlu0 %1336, %v1329
  %v1338 = vpop.permute.xlu0 %1337
  %v1340 = vmul.f32 %v1294, %v1333
  %v1341 = vmul.f32 %v1295, %v1333
  %v1342 = vmul.f32 %v1296, %v1338
  %v1343 = vmul.f32 %v1297, %v1338
  %v1344 = vmul.f32 %v1304, %v1328
  %v1345 = vmul.f32 %v1305, %v1329
  %1348 = vrot.lane.b32.xlu0 %v1344, 1
  %v1349 = vpop.permute.xlu0 %1348
  %1350 = vrot.lane.b32.xlu0 %v1345, 1
  %v1351 = vpop.permute.xlu0 %1350
  %v1354 = vsub.f32 %v22, %v1349
  %v1355 = vsub.f32 %v23, %v1351
  %1357 = vset.pattern.permute.xlu0 5
  %1358 = vperm.xlu0 %1357, %v1354
  %v1359 = vpop.permute.xlu0 %1358
  %1362 = vset.pattern.permute.xlu0 5
  %1363 = vperm.xlu0 %1362, %v1355
  %v1364 = vpop.permute.xlu0 %1363
  %v1366 = vadd.f32 %v1340, %v1359
  %v1367 = vadd.f32 %v1341, %v1359
  %v1368 = vadd.f32 %v1342, %v1364
  %v1369 = vadd.f32 %v1343, %v1364
  %v1370 = vmul.f32 %v1366, %v155
  %v1371 = vmul.f32 %v1367, %v155
  %v1372 = vmul.f32 %v1368, %v155
  %v1373 = vmul.f32 %v1369, %v155
  %v1374 = vadd.f32 %v1370, %v112
  %v1375 = vadd.f32 %v1371, %v114
  %v1376 = vadd.f32 %v1372, %v118
  %v1377 = vadd.f32 %v1373, %v120
  %v1379 = vsel %vm1206, %v20, 0
  %v1382 = vsel %vm1206, %v21, 0
  %1384 = vmatprep.subr.mxu0 0.0
  %1385 = vmatpush1.msra.mxu0 0.0
  %1386 = vmatprep.subr.mxu0 0.0
  %1387 = vmatpush1.msra.mxu0 0.0
  %1388 = vmatprep.subr.mxu0 0.0
  %1389 = vmatpush1.msra.mxu0 0.0
  %1390 = vmatprep.subr.mxu0 0.0
  %1391 = vmatpush1.msra.mxu0 0.0
  %1392 = vmatprep.subr.mxu0 0.0
  %1393 = vmatpush1.msra.mxu0 0.0
  %1394 = vmatprep.subr.mxu0 0.0
  %1395 = vmatpush1.msra.mxu0 0.0
  %1396 = vmatprep.subr.mxu0 0.0
  %1397 = vmatpush1.msra.mxu0 0.0
  %1398 = vmatprep.subr.mxu0 0.0
  %1399 = vmatpush1.msra.mxu0 0.0
  %1400 = vmatprep.subr.mxu0 0.0
  %1401 = vmatpush1.msra.mxu0 0.0
  %1402 = vmatprep.subr.mxu0 0.0
  %1403 = vmatpush1.msra.mxu0 0.0
  %1404 = vmatprep.subr.mxu0 0.0
  %1405 = vmatpush1.msra.mxu0 0.0
  %1406 = vmatprep.subr.mxu0 0.0
  %1407 = vmatpush1.msra.mxu0 0.0
  %1408 = vmatprep.subr.mxu0 0.0
  %1409 = vmatpush1.msra.mxu0 0.0
  %1410 = vmatprep.subr.mxu0 0.0
  %1411 = vmatpush1.msra.mxu0 0.0
  %1412 = vmatprep.subr.mxu0 %v1377
  %1413 = vmatpush1.msra.mxu0 %v1376
  %1414 = vmatprep.subr.mxu0 %v1375
  %1415 = vmatpush1.msra.mxu0 %v1374
  %1416 = vmatprep.subr.mxu0 0.0
  %1417 = vmatpush2.msra.mxu0 0.0
  %1418 = vmatprep.subr.mxu0 0.0
  %1419 = vmatpush2.msra.mxu0 0.0
  %1420 = vmatprep.subr.mxu0 0.0
  %1421 = vmatpush2.msra.mxu0 0.0
  %1422 = vmatprep.subr.mxu0 0.0
  %1423 = vmatpush2.msra.mxu0 0.0
  %1424 = vmatprep.subr.mxu0 0.0
  %1425 = vmatpush2.msra.mxu0 0.0
  %1426 = vmatprep.subr.mxu0 0.0
  %1427 = vmatpush2.msra.mxu0 0.0
  %1428 = vmatprep.subr.mxu0 0.0
  %1429 = vmatpush2.msra.mxu0 0.0
  %1430 = vmatprep.subr.mxu0 0.0
  %1431 = vmatpush2.msra.mxu0 0.0
  %1432 = vmatprep.subr.mxu0 0.0
  %1433 = vmatpush2.msra.mxu0 0.0
  %1434 = vmatprep.subr.mxu0 0.0
  %1435 = vmatpush2.msra.mxu0 0.0
  %1436 = vmatprep.subr.mxu0 0.0
  %1437 = vmatpush2.msra.mxu0 0.0
  %1438 = vmatprep.subr.mxu0 0.0
  %1439 = vmatpush2.msra.mxu0 0.0
  %1440 = vmatprep.subr.mxu0 0.0
  %1441 = vmatpush2.msra.mxu0 0.0
  %1442 = vmatprep.subr.mxu0 0.0
  %1443 = vmatpush2.msra.mxu0 0.0
  %1444 = vmatprep.subr.mxu0 0.0
  %1445 = vmatpush2.msra.mxu0 0.0
  %1446 = vmatprep.subr.mxu0 0.0
  %1447 = vmatpush2.msra.mxu0 0.0
  %1448 = vmatprep.mubr.f32.mxu0 0.0
  %1449 = vmatmul.mubr.f32.gmra.mxu0 %v1379
  %v1450 = vpop.f32.mrf.mxu0
  %v1451 = vadd.f32 0.0, %v1450
  %v1452 = vpop.f32.mrf.mxu0
  %v1453 = vadd.f32 0.0, %v1452
  %1454 = vmatprep.mubr.f32.mxu0 0.0
  %1455 = vmatmul.mubr.f32.gmra.mxu0 %v1382
  %v1456 = vpop.f32.mrf.mxu0
  %v1457 = vadd.f32 0.0, %v1456
  %v1458 = vpop.f32.mrf.mxu0
  %v1459 = vadd.f32 0.0, %v1458
  %1460 = vdwg.mxu0
  %1461 = vadd.xlane.f32.xlu0 %v1451
  %v1462 = vpop.xlane.xlu0 %1461
  %1463 = vadd.xlane.f32.xlu0 %v1457
  %v1464 = vpop.xlane.xlu0 %1463
  %v1465 = vmul.f32 %v1462, 0.03125
  %v1466 = vmul.f32 %v1464, 0.03125
  %v1467 = vadd.f32 %v1465, %v22
  %v1468 = vadd.f32 %v1466, %v23
  %v1469 = vxor.u32 %v1467, 2147483648
  %v1470 = vxor.u32 %v1468, 2147483648
  %v1471 = vmul.f32 %v1469, 1.442695
  %v1472 = vpow.pop %v1471
  %v1473 = vmul.f32 %v1470, 1.442695
  %v1474 = vpow.pop %v1473
  %v1475 = vadd.f32 %v1472, 1.0
  %v1476 = vadd.f32 %v1474, 1.0
  %v1477 = vrcp.pop %v1475
  %v1478 = vmul.f32 1.0, %v1477
  %v1479 = vrcp.pop %v1476
  %v1480 = vmul.f32 1.0, %v1479
  %1481 = vset.pattern.permute.xlu0 6
  %1482 = vperm.xlu0 %1481, %v22
  %v1483 = vpop.permute.xlu0 %1482
  %1485 = vset.pattern.permute.xlu0 6
  %1486 = vperm.xlu0 %1485, %v23
  %v1487 = vpop.permute.xlu0 %1486
  %v1489 = vadd.f32 %v1374, %v1483
  %v1490 = vadd.f32 %v1376, %v1487
  %1492 = vset.pattern.permute.xlu0 7
  %1493 = vperm.xlu0 %1492, %v1478
  %v1494 = vpop.permute.xlu0 %1493
  %1497 = vset.pattern.permute.xlu0 7
  %1498 = vperm.xlu0 %1497, %v1480
  %v1499 = vpop.permute.xlu0 %1498
  %v1501 = vmul.f32 %v1489, %v1494
  %v1502 = vmul.f32 %v1490, %v1499
  %v1503 = vpack.c.bf16 %v1502, %v1501
  %v1505 = vunpack.c.l.b16 %v1503
  %v1506 = vunpack.c.h.b16 %v1503
  %v1507 = vpack.c.b16 %v1505, %v1505
  %v1508 = vpack.c.b16 %v1506, %v1506
  %1511 = vst [vmem:[%s2] sm:$0xf] %v1507
  %1512 = vst [vmem:[%s2 + $0x8] sm:$0xf] %v1508
  %1513 = vadd.xlane.f32.xlu0 %v1453
  %v1514 = vpop.xlane.xlu0 %1513
  %1515 = vadd.xlane.f32.xlu0 %v1459
  %v1516 = vpop.xlane.xlu0 %1515
  %v1517 = vmul.f32 %v1514, 0.03125
  %v1518 = vmul.f32 %v1516, 0.03125
  %v1519 = vadd.f32 %v1517, %v22
  %v1520 = vadd.f32 %v1518, %v23
  %v1521 = vxor.u32 %v1519, 2147483648
  %v1522 = vxor.u32 %v1520, 2147483648
  %v1523 = vmul.f32 %v1521, 1.442695
  %v1524 = vpow.pop %v1523
  %v1525 = vmul.f32 %v1522, 1.442695
  %v1526 = vpow.pop %v1525
  %v1527 = vadd.f32 %v1524, 1.0
  %v1528 = vadd.f32 %v1526, 1.0
  %v1529 = vrcp.pop %v1527
  %v1530 = vmul.f32 1.0, %v1529
  %v1531 = vrcp.pop %v1528
  %v1532 = vmul.f32 1.0, %v1531
  %v1533 = vadd.f32 %v1375, %v1483
  %v1534 = vadd.f32 %v1377, %v1487
  %1536 = vset.pattern.permute.xlu0 7
  %1537 = vperm.xlu0 %1536, %v1530
  %v1538 = vpop.permute.xlu0 %1537
  %1541 = vset.pattern.permute.xlu0 7
  %1542 = vperm.xlu0 %1541, %v1532
  %v1543 = vpop.permute.xlu0 %1542
  %v1545 = vmul.f32 %v1533, %v1538
  %v1546 = vmul.f32 %v1534, %v1543
  %v1547 = vpack.c.bf16 %v1546, %v1545
  %v1549 = vunpack.c.l.b16 %v1547
  %v1550 = vunpack.c.h.b16 %v1547
  %v1551 = vpack.c.b16 %v1549, %v1549
  %v1552 = vpack.c.b16 %v1550, %v1550
  %1555 = vst [vmem:[%s2 + $0x4] sm:$0xf] %v1551
  %1556 = vst [vmem:[%s2 + $0xc] sm:$0xf] %v1552
  // Predicated region
  $region10: #{bottle2neck.1} parent=0 // pred_check
    _
  $region11: #{bottle2neck.1} parent=0 // pred_check_branch
    %1558 = sbr.rel (0) target = $region13
  $region12: #{bottle2neck.1} parent=0 // pred_region
    _
  $region13: #{bottle2neck.1} parent=0 // pred_fallthru
    _
  // Predicated region
  $region14: #{bottle2neck.1} parent=0 // pred_check
    _
  $region15: #{bottle2neck.1} parent=0 // pred_check_branch
    %1560 = sbr.rel (0) target = $region17
  $region16: #{bottle2neck.1} parent=0 // pred_region
    _
  $region17: #{bottle2neck.1} parent=0 // pred_fallthru
    _

</llo_original>
